<compile_context>
chip_gen: v7x
topology: tpu7x:2x2x1
jax: 0.10.0
libtpu: 0.0.40
codegen_flags: <defaults>
</compile_context>

<pallas_src>
import jax
import jax.numpy as jnp
from jax import lax
from jax.experimental import pallas as pl
from jax.experimental.pallas import tpu as pltpu

# Small, BERT-like-but-tiny configuration.
B = 32                # batch (multiple of TILE_B -> 2 parallel grid steps)
S = 16                # sequence length
H = 32                # embedding_dim (bert hidden_size stand-in)
NUM_FILTERS = 8
FILTER_SIZES = (2, 3, 4)
NB = len(FILTER_SIZES)
FS_MAX = max(FILTER_SIZES)
NUM_CLASSES = 4
VOCAB = 50
VOCAB_PAD = 128       # vocab padded to a full lane width for the one-hot matmul
NOUT = NB * NUM_FILTERS   # 24 real conv channels
NOUT_PAD = 128            # lane-dense padding of conv-channel / logits dims
TILE_B = 16               # batch tile per grid step
NEG = -1e30               # finite "-inf" (avoids -inf * 0 = nan in the fc matmul)

# aux row layout (all rows padded to NOUT_PAD lanes):
ROW_CONV_B = 0                    # conv bias               [1, NOUT_PAD]
ROW_FC_B = 1                      # fc bias                 [1, NOUT_PAD]
ROW_MASK = 8                      # additive time mask      [S, NOUT_PAD]
ROW_FC_W = 32                     # fc weight (untransposed)[NOUT_PAD, NOUT_PAD]
AUX_ROWS = ROW_FC_W + NOUT_PAD    # 160

assert B % TILE_B == 0            # no ragged-tail handling needed
assert S >= FS_MAX                # every branch has >= 1 valid position
assert FS_MAX * H == 128


def cnn_kernel(ids_ref, table_ref, wconv_ref, aux_ref, out_ref):
    """Embedding gather (one-hot MXU) -> conv -> ReLU -> masked max -> Linear."""
    # --- Embedding lookup as an exact f32 one-hot matmul on the MXU. ---------
    ids = ids_ref[...]                                              # [TILE_B*S, 1] int32
    vocab_iota = lax.broadcasted_iota(jnp.int32, (TILE_B * S, VOCAB_PAD), 1)
    onehot = (vocab_iota == ids).astype(jnp.float32)                # [TILE_B*S, 128]
    emb = jnp.dot(onehot, table_ref[...],
                  preferred_element_type=jnp.float32)               # [TILE_B*S, H] f32

    # --- Conv: FS_MAX accumulating K=H matmuls over time-shifted slices. -----
    # Positions past the valid range read zero-padded rows; they are discarded
    # by the additive -inf mask below, so correctness never depends on them.
    emb3 = emb.reshape(TILE_B, S, H)
    emb_pad = jnp.concatenate(
        [emb3, jnp.zeros((TILE_B, FS_MAX - 1, H), jnp.float32)], axis=1)
    acc = jnp.zeros((TILE_B * S, NOUT_PAD), jnp.float32)
    for i in range(FS_MAX):                                         # static unroll
        lhs = emb_pad[:, i:i + S, :].reshape(TILE_B * S, H).astype(jnp.bfloat16)
        acc = acc + jnp.dot(lhs, wconv_ref[i * H:(i + 1) * H, :],
                            preferred_element_type=jnp.float32)
    scores = acc.reshape(TILE_B, S, NOUT_PAD)

    # --- Bias, ReLU, precomputed additive -inf time mask, max-over-time. -----
    scores = scores + aux_ref[ROW_CONV_B:ROW_CONV_B + 1, :].reshape(1, 1, NOUT_PAD)
    act = jnp.maximum(scores, 0.0)
    act = act + aux_ref[ROW_MASK:ROW_MASK + S, :].reshape(1, S, NOUT_PAD)
    pooled = jnp.max(act, axis=1)                                   # [TILE_B, NOUT_PAD]

    # --- Final Linear (dropout = identity in eval mode); lane-dense output. --
    fc_w = aux_ref[ROW_FC_W:ROW_FC_W + NOUT_PAD, :]                 # [128, 128] f32
    logits = jnp.dot(pooled, fc_w, preferred_element_type=jnp.float32)
    out_ref[...] = logits + aux_ref[ROW_FC_B:ROW_FC_B + 1, :]       # [TILE_B, 128]


def pack_params(p):
    """One-time host-side packing into lane-dense (128-wide) blocks."""
    # Conv weights: taps along rows (i*H..), all three filter banks along lanes;
    # taps i >= fs_j stay zero.
    w = jnp.zeros((FS_MAX * H, NOUT_PAD), jnp.float32)
    for j, (fs, wk) in enumerate(zip(FILTER_SIZES, ("w2", "w3", "w4"))):
        w = w.at[:fs * H, j * NUM_FILTERS:(j + 1) * NUM_FILTERS].set(
            p[wk].reshape(fs * H, NUM_FILTERS))

    aux = jnp.zeros((AUX_ROWS, NOUT_PAD), jnp.float32)
    conv_b = jnp.concatenate([p["b2"], p["b3"], p["b4"]], axis=1)   # [1, NOUT]
    aux = aux.at[ROW_CONV_B, :NOUT].set(conv_b[0])
    aux = aux.at[ROW_FC_B, :NUM_CLASSES].set(p["fc_b"][0])
    # Additive mask: branch j (filter size fs) is valid only for t <= S - fs.
    for j, fs in enumerate(FILTER_SIZES):
        aux = aux.at[ROW_MASK + S - fs + 1:ROW_MASK + S,
                     j * NUM_FILTERS:(j + 1) * NUM_FILTERS].set(NEG)
    # fc weight stored UNtransposed -> canonical (last-dim x first-dim) matmul.
    aux = aux.at[ROW_FC_W:ROW_FC_W + NOUT, :NUM_CLASSES].set(p["fc_w"])

    table = jnp.zeros((VOCAB_PAD, H), jnp.float32).at[:VOCAB].set(p["emb_table"])
    return {"table": table, "w_conv": w.astype(jnp.bfloat16), "aux": aux}


def yelp_cnn_forward(input_ids, attention_mask, packed):
    # TODO(synk): attention_mask is only consumed inside the (stubbed) BERT.
    del attention_mask
    ids = input_ids.reshape(B * S, 1).astype(jnp.int32)             # 4 B/token

    out = pl.pallas_call(
        cnn_kernel,
        out_shape=jax.ShapeDtypeStruct((B, NOUT_PAD), jnp.float32),
        grid=(B // TILE_B,),
        in_specs=[
            pl.BlockSpec((TILE_B * S, 1), lambda i: (i, 0)),          # ids (per tile)
            pl.BlockSpec((VOCAB_PAD, H), lambda i: (0, 0)),           # emb table (resident)
            pl.BlockSpec((FS_MAX * H, NOUT_PAD), lambda i: (0, 0)),   # conv weights
            pl.BlockSpec((AUX_ROWS, NOUT_PAD), lambda i: (0, 0)),     # packed aux
        ],
        out_specs=pl.BlockSpec((TILE_B, NOUT_PAD), lambda i: (i, 0)),
        compiler_params=pltpu.CompilerParams(
            dimension_semantics=("parallel",)),
    )(ids, packed["table"], packed["w_conv"], packed["aux"])
    return out[:, :NUM_CLASSES]


def reference_forward(input_ids, params):
    """Pure-JAX f32 reference mirroring the PyTorch semantics (dropout = id)."""
    emb = params["emb_table"][input_ids].astype(jnp.float32)        # [B, S, H]
    pooled_all = []
    for fs, wk, bk in ((FILTER_SIZES[0], "w2", "b2"),
                       (FILTER_SIZES[1], "w3", "b3"),
                       (FILTER_SIZES[2], "w4", "b4")):
        L = S - fs + 1
        w = params[wk]                                              # [fs, H, F]
        acc = jnp.zeros((B, L, NUM_FILTERS), jnp.float32)
        for i in range(fs):
            acc = acc + jnp.einsum("blh,hf->blf", emb[:, i:i + L, :], w[i])
        acc = acc + params[bk].reshape(1, 1, NUM_FILTERS)
        pooled_all.append(jnp.max(jnp.maximum(acc, 0.0), axis=1))
    cat = jnp.concatenate(pooled_all, axis=1)                       # [B, 3F]
    return cat @ params["fc_w"] + params["fc_b"].reshape(1, NUM_CLASSES)


def init_params(key):
    ks = jax.random.split(key, 9)
    return {
        "emb_table": 0.1 * jax.random.normal(ks[0], (VOCAB, H), jnp.float32),
        "w2": 0.1 * jax.random.normal(ks[1], (FILTER_SIZES[0], H, NUM_FILTERS), jnp.float32),
        "b2": 0.1 * jax.random.normal(ks[2], (1, NUM_FILTERS), jnp.float32),
        "w3": 0.1 * jax.random.normal(ks[3], (FILTER_SIZES[1], H, NUM_FILTERS), jnp.float32),
        "b3": 0.1 * jax.random.normal(ks[4], (1, NUM_FILTERS), jnp.float32),
        "w4": 0.1 * jax.random.normal(ks[5], (FILTER_SIZES[2], H, NUM_FILTERS), jnp.float32),
        "b4": 0.1 * jax.random.normal(ks[6], (1, NUM_FILTERS), jnp.float32),
        "fc_w": 0.1 * jax.random.normal(ks[7], (NUM_FILTERS * NB, NUM_CLASSES), jnp.float32),
        "fc_b": 0.1 * jax.random.normal(ks[8], (1, NUM_CLASSES), jnp.float32),
    }


if __name__ == "__main__":
    key = jax.random.PRNGKey(0)
    k_param, k_ids = jax.random.split(key)
    params = init_params(k_param)
    packed = pack_params(params)   # one-time host-side parameter packing

    input_ids = jax.random.randint(k_ids, (B, S), 0, VOCAB, dtype=jnp.int32)
    attention_mask = jnp.ones((B, S), dtype=jnp.int32)

    fwd = jax.jit(yelp_cnn_forward)
    logits = jax.block_until_ready(fwd(input_ids, attention_mask, packed))

    ref = reference_forward(input_ids, params)
    assert logits.shape == (B, NUM_CLASSES)
    # Only the conv matmul uses bf16 operands (f32 accumulation); the embedding
    # gather, epilogue and fc stay f32 -> observed error is O(1e-3).
    assert jnp.allclose(logits, ref, atol=2e-2, rtol=2e-2), "mismatch vs reference"

    print("KERNEL_OK")
</pallas_src>

<mosaic_0001>
module attributes {stable_mosaic.version = 11 : i64} {
  func.func @cnn_kernel(%arg0: i32, %arg1: memref<256x1xi32, #tpu.memory_space<vmem>>, %arg2: memref<128x32xf32, #tpu.memory_space<vmem>>, %arg3: memref<128x128xbf16, #tpu.memory_space<vmem>>, %arg4: memref<160x128xf32, #tpu.memory_space<vmem>>, %arg5: memref<16x128xf32, #tpu.memory_space<vmem>>) attributes {dimension_semantics = [#tpu.dimension_semantics<parallel>], iteration_bounds = array<i64: 2>, scalar_prefetch = 0 : i64, scratch_operands = 0 : i64, tpu.core_type = #tpu.core_type<tc>, window_params = [{transform_indices = @transform_0, window_bounds = array<i64: 256, 1>}, {pipeline_mode = #tpu.pipeline_mode<synchronous>, transform_indices = @transform_1, window_bounds = array<i64: 128, 32>}, {pipeline_mode = #tpu.pipeline_mode<synchronous>, transform_indices = @transform_2, window_bounds = array<i64: 128, 128>}, {pipeline_mode = #tpu.pipeline_mode<synchronous>, transform_indices = @transform_3, window_bounds = array<i64: 160, 128>}, {transform_indices = @transform_4, window_bounds = array<i64: 16, 128>}]} {
    %c0 = arith.constant 0 : index
    %c0_0 = arith.constant 0 : index
    %0 = vector.load %arg1[%c0, %c0_0] : memref<256x1xi32, #tpu.memory_space<vmem>>, vector<256x1xi32>
    %1 = tpu.iota {dimensions = array<i32: 1>} : vector<256x128xi32>
    %2 = vector.broadcast %0 : vector<256x1xi32> to vector<256x128xi32>
    %3 = arith.cmpi eq, %1, %2 : vector<256x128xi32>
    %4 = arith.extui %3 : vector<256x128xi1> to vector<256x128xi32>
    %5 = arith.sitofp %4 : vector<256x128xi32> to vector<256x128xf32>
    %c0_1 = arith.constant 0 : index
    %c0_2 = arith.constant 0 : index
    %6 = vector.load %arg2[%c0_1, %c0_2] : memref<128x32xf32, #tpu.memory_space<vmem>>, vector<128x32xf32>
    %cst = arith.constant dense<0.000000e+00> : vector<256x32xf32>
    %7 = tpu.matmul %5, %6, %cst {dimension_numbers = #tpu.dot_dimension_numbers<[1], [0], [0], [1], [0, 0, 1, 1], [], []>} : vector<256x128xf32>, vector<128x32xf32>, vector<256x32xf32> -> vector<256x32xf32>
    %8 = vector.shape_cast %7 : vector<256x32xf32> to vector<16x16x32xf32>
    %cst_3 = arith.constant 0.000000e+00 : f32
    %9 = vector.broadcast %cst_3 : f32 to vector<16x3x32xf32>
    %10 = tpu.concatenate %8, %9 in 1 : vector<16x16x32xf32>, vector<16x3x32xf32> -> vector<16x19x32xf32>
    %cst_4 = arith.constant 0.000000e+00 : f32
    %11 = vector.broadcast %cst_4 : f32 to vector<256x128xf32>
    %12 = vector.extract_strided_slice %10 {offsets = [0, 0, 0], sizes = [16, 16, 32], strides = [1, 1, 1]} : vector<16x19x32xf32> to vector<16x16x32xf32>
    %13 = vector.shape_cast %12 : vector<16x16x32xf32> to vector<256x32xf32>
    %14 = arith.truncf %13 : vector<256x32xf32> to vector<256x32xbf16>
    %c0_5 = arith.constant 0 : index
    %c0_6 = arith.constant 0 : index
    %15 = vector.load %arg3[%c0_5, %c0_6] : memref<128x128xbf16, #tpu.memory_space<vmem>>, vector<32x128xbf16>
    %cst_7 = arith.constant dense<0.000000e+00> : vector<256x128xf32>
    %16 = tpu.matmul %14, %15, %cst_7 {dimension_numbers = #tpu.dot_dimension_numbers<[1], [0], [0], [1], [0, 0, 1, 1], [], []>} : vector<256x32xbf16>, vector<32x128xbf16>, vector<256x128xf32> -> vector<256x128xf32>
    %17 = arith.addf %11, %16 : vector<256x128xf32>
    %18 = vector.extract_strided_slice %10 {offsets = [0, 1, 0], sizes = [16, 16, 32], strides = [1, 1, 1]} : vector<16x19x32xf32> to vector<16x16x32xf32>
    %19 = vector.shape_cast %18 : vector<16x16x32xf32> to vector<256x32xf32>
    %20 = arith.truncf %19 : vector<256x32xf32> to vector<256x32xbf16>
    %c32 = arith.constant 32 : index
    %c0_8 = arith.constant 0 : index
    %21 = vector.load %arg3[%c32, %c0_8] : memref<128x128xbf16, #tpu.memory_space<vmem>>, vector<32x128xbf16>
    %cst_9 = arith.constant dense<0.000000e+00> : vector<256x128xf32>
    %22 = tpu.matmul %20, %21, %cst_9 {dimension_numbers = #tpu.dot_dimension_numbers<[1], [0], [0], [1], [0, 0, 1, 1], [], []>} : vector<256x32xbf16>, vector<32x128xbf16>, vector<256x128xf32> -> vector<256x128xf32>
    %23 = arith.addf %17, %22 : vector<256x128xf32>
    %24 = vector.extract_strided_slice %10 {offsets = [0, 2, 0], sizes = [16, 16, 32], strides = [1, 1, 1]} : vector<16x19x32xf32> to vector<16x16x32xf32>
    %25 = vector.shape_cast %24 : vector<16x16x32xf32> to vector<256x32xf32>
    %26 = arith.truncf %25 : vector<256x32xf32> to vector<256x32xbf16>
    %c64 = arith.constant 64 : index
    %c0_10 = arith.constant 0 : index
    %27 = vector.load %arg3[%c64, %c0_10] : memref<128x128xbf16, #tpu.memory_space<vmem>>, vector<32x128xbf16>
    %cst_11 = arith.constant dense<0.000000e+00> : vector<256x128xf32>
    %28 = tpu.matmul %26, %27, %cst_11 {dimension_numbers = #tpu.dot_dimension_numbers<[1], [0], [0], [1], [0, 0, 1, 1], [], []>} : vector<256x32xbf16>, vector<32x128xbf16>, vector<256x128xf32> -> vector<256x128xf32>
    %29 = arith.addf %23, %28 : vector<256x128xf32>
    %30 = vector.extract_strided_slice %10 {offsets = [0, 3, 0], sizes = [16, 16, 32], strides = [1, 1, 1]} : vector<16x19x32xf32> to vector<16x16x32xf32>
    %31 = vector.shape_cast %30 : vector<16x16x32xf32> to vector<256x32xf32>
    %32 = arith.truncf %31 : vector<256x32xf32> to vector<256x32xbf16>
    %c96 = arith.constant 96 : index
    %c0_12 = arith.constant 0 : index
    %33 = vector.load %arg3[%c96, %c0_12] : memref<128x128xbf16, #tpu.memory_space<vmem>>, vector<32x128xbf16>
    %cst_13 = arith.constant dense<0.000000e+00> : vector<256x128xf32>
    %34 = tpu.matmul %32, %33, %cst_13 {dimension_numbers = #tpu.dot_dimension_numbers<[1], [0], [0], [1], [0, 0, 1, 1], [], []>} : vector<256x32xbf16>, vector<32x128xbf16>, vector<256x128xf32> -> vector<256x128xf32>
    %35 = arith.addf %29, %34 : vector<256x128xf32>
    %36 = vector.shape_cast %35 : vector<256x128xf32> to vector<16x16x128xf32>
    %c0_14 = arith.constant 0 : index
    %c0_15 = arith.constant 0 : index
    %37 = vector.load %arg4[%c0_14, %c0_15] : memref<160x128xf32, #tpu.memory_space<vmem>>, vector<1x128xf32>
    %38 = vector.shape_cast %37 : vector<1x128xf32> to vector<1x1x128xf32>
    %39 = vector.broadcast %38 : vector<1x1x128xf32> to vector<16x16x128xf32>
    %40 = arith.addf %36, %39 : vector<16x16x128xf32>
    %cst_16 = arith.constant 0.000000e+00 : f32
    %41 = vector.broadcast %cst_16 : f32 to vector<16x16x128xf32>
    %42 = arith.maximumf %40, %41 : vector<16x16x128xf32>
    %c8 = arith.constant 8 : index
    %c0_17 = arith.constant 0 : index
    %43 = vector.load %arg4[%c8, %c0_17] : memref<160x128xf32, #tpu.memory_space<vmem>>, vector<16x128xf32>
    %44 = vector.shape_cast %43 : vector<16x128xf32> to vector<1x16x128xf32>
    %45 = vector.broadcast %44 : vector<1x16x128xf32> to vector<16x16x128xf32>
    %46 = arith.addf %42, %45 : vector<16x16x128xf32>
    %cst_18 = arith.constant dense<0xFF800000> : vector<16x128xf32>
    %47 = vector.multi_reduction <maximumf>, %46, %cst_18 [1] : vector<16x16x128xf32> to vector<16x128xf32>
    %c32_19 = arith.constant 32 : index
    %c0_20 = arith.constant 0 : index
    %48 = vector.load %arg4[%c32_19, %c0_20] : memref<160x128xf32, #tpu.memory_space<vmem>>, vector<128x128xf32>
    %cst_21 = arith.constant dense<0.000000e+00> : vector<16x128xf32>
    %49 = tpu.matmul %47, %48, %cst_21 {dimension_numbers = #tpu.dot_dimension_numbers<[1], [0], [0], [1], [0, 0, 1, 1], [], []>} : vector<16x128xf32>, vector<128x128xf32>, vector<16x128xf32> -> vector<16x128xf32>
    %c1 = arith.constant 1 : index
    %c0_22 = arith.constant 0 : index
    %50 = vector.load %arg4[%c1, %c0_22] : memref<160x128xf32, #tpu.memory_space<vmem>>, vector<1x128xf32>
    %51 = vector.broadcast %50 : vector<1x128xf32> to vector<16x128xf32>
    %52 = arith.addf %49, %51 : vector<16x128xf32>
    %c0_23 = arith.constant 0 : index
    %c0_24 = arith.constant 0 : index
    %53 = vector.load %arg5[%c0_23, %c0_24] : memref<16x128xf32, #tpu.memory_space<vmem>>, vector<16x128xf32>
    tpu.vector_store %arg5[%c0_23, %c0_24], %52 {strides = array<i32>} : memref<16x128xf32, #tpu.memory_space<vmem>>, vector<16x128xf32>,
    return
  }
  func.func @transform_0(%arg0: i32) -> (i32, i32) {
    %c0_i32 = arith.constant 0 : i32
    %c0_i32_0 = arith.constant 0 : i32
    return %arg0, %c0_i32 : i32, i32
  }
  func.func @transform_1(%arg0: i32) -> (i32, i32) {
    %c0_i32 = arith.constant 0 : i32
    %c0_i32_0 = arith.constant 0 : i32
    %c0_i32_1 = arith.constant 0 : i32
    return %c0_i32, %c0_i32_0 : i32, i32
  }
  func.func @transform_2(%arg0: i32) -> (i32, i32) {
    %c0_i32 = arith.constant 0 : i32
    %c0_i32_0 = arith.constant 0 : i32
    %c0_i32_1 = arith.constant 0 : i32
    return %c0_i32, %c0_i32_0 : i32, i32
  }
  func.func @transform_3(%arg0: i32) -> (i32, i32) {
    %c0_i32 = arith.constant 0 : i32
    %c0_i32_0 = arith.constant 0 : i32
    %c0_i32_1 = arith.constant 0 : i32
    return %c0_i32, %c0_i32_0 : i32, i32
  }
  func.func @transform_4(%arg0: i32) -> (i32, i32) {
    %c0_i32 = arith.constant 0 : i32
    %c0_i32_0 = arith.constant 0 : i32
    return %arg0, %c0_i32 : i32, i32
  }
}

</mosaic_0001>

<llo_original>
// kernel: yelp_cnn_forward.1
$region0: #{yelp_cnn_forward.1}
  #allocation0 [shape = 'u32[]', space=smem, size = 0x4, offset = 0x4, fixed_abs, tag = 'smem constant byte address 0x4 - core index']
  #allocation1 [shape = 'u32[144,128]{1,0:T(1,128)}', space=vmem, size = 0x12000, scoped, tag = 'internal scratch']
  %s0 = inlined_call_operand.vmem [shape: s32[512,1], index: 0, kind: input, shape index: {}]
  %s1 = inlined_call_operand.vmem [shape: f32[128,32], index: 1, kind: input, shape index: {}]
  %s2 = inlined_call_operand.vmem [shape: bf16[128,128], index: 2, kind: input, shape index: {}]
  %s3 = inlined_call_operand.vmem [shape: f32[160,128], index: 3, kind: input, shape index: {}]
  %s4 = inlined_call_operand.vmem [shape: f32[32,128], index: 4, kind: output, shape index: {}]
  %s5 = sld [smem:[#allocation0]]
  $region49: #{yelp_cnn_forward.1} parent=0
    _
  %s7 = ssub.s32 1, %s5
  %s8 = scalar_select 0, %s7, %s5
  loop: start=0, step=1, limit=4
  $region2: #{yelp_cnn_forward.1} parent=0 // loop_pre_header
    _
  $region3: #{yelp_cnn_forward.1} parent=0 // loop_header
    %s10 = sphi 0, %s14
    %p11 = scmp.ge.s32.totalorder %s10, 4
    %s20 = sphi 0, %s22
    %s23 = sphi 0, %s20
    %s24 = sphi 0, %s23
    %s40 = sphi 0, %s24
    %s44 = sphi 0, %s44
    %s46 = sphi 0, %s44
    %s47 = sphi 0, %s46
    %s61 = sphi 0, %s47
    %s65 = sphi 0, %s65
    %s67 = sphi 0, %s65
    %s68 = sphi 0, %s67
    %s82 = sphi 0, %s68
    %s86 = sphi 0, %s86
    %s88 = sphi 0, %s86
    %s89 = sphi 0, %s88
    %s103 = sphi 0, %s89
    %s109 = sphi 0, %s111
    %s112 = sphi 0, %s109
    %s113 = sphi 0, %s112
    %s129 = sphi 0, %s113
  $region4: #{yelp_cnn_forward.1} parent=0 // loop_header_branch
    %13 = sbr.rel (%p11) target = $region8
  $region5: #{yelp_cnn_forward.1} parent=0 // loop_body
    %s15 = ssub.s32 %s10, 1
    %s16 = ssub.s32 %s10, 2
    %s17 = sadd.s32 %s10, 1
    %s18 = ssub.s32 %s10, %s17
    %p19 = scmp.eq.s32.totalorder %s18, 0
    %s21 = sadd.s32 %s20, 1
    %s22 = scalar_select %p19, %s20, %s21
    %p25 = pneg %p19
    %p26 = scmp.eq.s32.totalorder %s10, 1
    %p27 = por %p25, %p26
    %p28 = scmp.ne.s32.totalorder %s20, %s23
    %p29 = scmp.eq.s32.totalorder %s10, 0
    %p30 = por %p28, %p29
    %p31 = scmp.ne.s32.totalorder %s20, %s23
    %p32 = scmp.eq.s32.totalorder %s15, 1
    %p33 = por %p31, %p32
    %p34 = scmp.ne.s32.totalorder %s23, %s24
    %p35 = scmp.eq.s32.totalorder %s15, 0
    %p36 = por %p34, %p35
    %p37 = scmp.ne.s32.totalorder %s23, %s24
    %p38 = scmp.eq.s32.totalorder %s16, 1
    %p39 = por %p37, %p38
    %p41 = scmp.ne.s32.totalorder %s24, %s40
    %p42 = scmp.eq.s32.totalorder %s16, 0
    %p43 = por %p41, %p42
    %s45 = sadd.s32 %s44, 1
    %p48 = scmp.eq.s32.totalorder %s10, 1
    %p49 = scmp.ne.s32.totalorder %s44, %s46
    %p50 = scmp.eq.s32.totalorder %s10, 0
    %p51 = por %p49, %p50
    %p52 = scmp.ne.s32.totalorder %s44, %s46
    %p53 = scmp.eq.s32.totalorder %s15, 1
    %p54 = por %p52, %p53
    %p55 = scmp.ne.s32.totalorder %s46, %s47
    %p56 = scmp.eq.s32.totalorder %s15, 0
    %p57 = por %p55, %p56
    %p58 = scmp.ne.s32.totalorder %s46, %s47
    %p59 = scmp.eq.s32.totalorder %s16, 1
    %p60 = por %p58, %p59
    %p62 = scmp.ne.s32.totalorder %s47, %s61
    %p63 = scmp.eq.s32.totalorder %s16, 0
    %p64 = por %p62, %p63
    %s66 = sadd.s32 %s65, 1
    %p69 = scmp.eq.s32.totalorder %s10, 1
    %p70 = scmp.ne.s32.totalorder %s65, %s67
    %p71 = scmp.eq.s32.totalorder %s10, 0
    %p72 = por %p70, %p71
    %p73 = scmp.ne.s32.totalorder %s65, %s67
    %p74 = scmp.eq.s32.totalorder %s15, 1
    %p75 = por %p73, %p74
    %p76 = scmp.ne.s32.totalorder %s67, %s68
    %p77 = scmp.eq.s32.totalorder %s15, 0
    %p78 = por %p76, %p77
    %p79 = scmp.ne.s32.totalorder %s67, %s68
    %p80 = scmp.eq.s32.totalorder %s16, 1
    %p81 = por %p79, %p80
    %p83 = scmp.ne.s32.totalorder %s68, %s82
    %p84 = scmp.eq.s32.totalorder %s16, 0
    %p85 = por %p83, %p84
    %s87 = sadd.s32 %s86, 1
    %p90 = scmp.eq.s32.totalorder %s10, 1
    %p91 = scmp.ne.s32.totalorder %s86, %s88
    %p92 = scmp.eq.s32.totalorder %s10, 0
    %p93 = por %p91, %p92
    %p94 = scmp.ne.s32.totalorder %s86, %s88
    %p95 = scmp.eq.s32.totalorder %s15, 1
    %p96 = por %p94, %p95
    %p97 = scmp.ne.s32.totalorder %s88, %s89
    %p98 = scmp.eq.s32.totalorder %s15, 0
    %p99 = por %p97, %p98
    %p100 = scmp.ne.s32.totalorder %s88, %s89
    %p101 = scmp.eq.s32.totalorder %s16, 1
    %p102 = por %p100, %p101
    %p104 = scmp.ne.s32.totalorder %s89, %s103
    %p105 = scmp.eq.s32.totalorder %s16, 0
    %p106 = por %p104, %p105
    %s107 = ssub.s32 %s10, %s17
    %p108 = scmp.eq.s32.totalorder %s107, 0
    %s110 = sadd.s32 %s109, 1
    %s111 = scalar_select %p108, %s109, %s110
    %p114 = pneg %p108
    %p115 = scmp.eq.s32.totalorder %s10, 1
    %p116 = por %p114, %p115
    %p117 = scmp.ne.s32.totalorder %s109, %s112
    %p118 = scmp.eq.s32.totalorder %s10, 0
    %p119 = por %p117, %p118
    %p120 = scmp.ne.s32.totalorder %s109, %s112
    %p121 = scmp.eq.s32.totalorder %s15, 1
    %p122 = por %p120, %p121
    %p123 = scmp.ne.s32.totalorder %s112, %s113
    %p124 = scmp.eq.s32.totalorder %s15, 0
    %p125 = por %p123, %p124
    %p126 = scmp.ne.s32.totalorder %s112, %s113
    %p127 = scmp.eq.s32.totalorder %s16, 1
    %p128 = por %p126, %p127
    %p130 = scmp.ne.s32.totalorder %s113, %s129
    %p131 = scmp.eq.s32.totalorder %s16, 0
    %p132 = por %p130, %p131
    %p133 = scmp.le.s32.totalorder 1, %s10
    %p134 = scmp.lt.s32.totalorder %s10, 3
    %p135 = pnand %p133, %p134
    %p136 = pneg %p135
    // Predicated region
    $region9: #{yelp_cnn_forward.1} parent=5 // pred_check
      _
    $region10: #{yelp_cnn_forward.1} parent=5 // pred_check_branch
      %138 = sbr.rel (%p135) target = $region12
    $region11: #{yelp_cnn_forward.1} parent=5 // pred_region
      %s139 = ssub.s32 %s10, 1
      // Predicated region
      $region13: #{yelp_cnn_forward.1} parent=11 // pred_check
        %p140 = pneg %p57
      $region14: #{yelp_cnn_forward.1} parent=11 // pred_check_branch
        %142 = sbr.rel (%p140) target = $region16
      $region15: #{yelp_cnn_forward.1} parent=11 // pred_region
        _
      $region16: #{yelp_cnn_forward.1} parent=11 // pred_fallthru
        _
      // Predicated region
      $region17: #{yelp_cnn_forward.1} parent=11 // pred_check
        %p143 = pneg %p78
      $region18: #{yelp_cnn_forward.1} parent=11 // pred_check_branch
        %145 = sbr.rel (%p143) target = $region20
      $region19: #{yelp_cnn_forward.1} parent=11 // pred_region
        _
      $region20: #{yelp_cnn_forward.1} parent=11 // pred_fallthru
        _
      // Predicated region
      $region21: #{yelp_cnn_forward.1} parent=11 // pred_check
        %p146 = pneg %p99
      $region22: #{yelp_cnn_forward.1} parent=11 // pred_check_branch
        %148 = sbr.rel (%p146) target = $region24
      $region23: #{yelp_cnn_forward.1} parent=11 // pred_region
        _
      $region24: #{yelp_cnn_forward.1} parent=11 // pred_fallthru
        _
    $region12: #{yelp_cnn_forward.1} parent=5 // pred_fallthru
      _
    %p149 = scmp.lt.s32.totalorder %s10, 2
    // Predicated region
    $region25: #{yelp_cnn_forward.1} parent=5 // pred_check
      %p150 = pneg %p149
    $region26: #{yelp_cnn_forward.1} parent=5 // pred_check_branch
      %152 = sbr.rel (%p150) target = $region28
    $region27: #{yelp_cnn_forward.1} parent=5 // pred_region
      // Predicated region
      $region29: #{yelp_cnn_forward.1} parent=27 // pred_check
        %p153 = pneg %p30
      $region30: #{yelp_cnn_forward.1} parent=27 // pred_check_branch
        %155 = sbr.rel (%p153) target = $region32
      $region31: #{yelp_cnn_forward.1} parent=27 // pred_region
        %s156 = smul.u32 32, %s10
        %p157 = scmp.lt.s32.totalorder %s156, 63
        %s158 = scalar_select %p157, %s156, 63
        %s159 = smul.addr %s158, 8
        %s160 = scalar_lea.vmem %s0, %s159
        %s161 = smul.u32 32, %s10
      $region32: #{yelp_cnn_forward.1} parent=27 // pred_fallthru
        _
    $region28: #{yelp_cnn_forward.1} parent=5 // pred_fallthru
      _
    %p162 = scmp.le.s32.totalorder 1, %s10
    %p163 = scmp.lt.s32.totalorder %s10, 3
    %p164 = pnand %p162, %p163
    %p165 = pneg %p164
    // Predicated region
    $region33: #{yelp_cnn_forward.1} parent=5 // pred_check
      _
    $region34: #{yelp_cnn_forward.1} parent=5 // pred_check_branch
      %167 = sbr.rel (%p164) target = $region36
    $region35: #{yelp_cnn_forward.1} parent=5 // pred_region
      %s168 = ssub.s32 %s10, 1
      %s169 = smul.u32 32, %s15
      %p170 = scmp.lt.s32.totalorder %s169, 63
      %s171 = scalar_select %p170, %s169, 63
      %s172 = smul.addr %s171, 8
      %s173 = scalar_lea.vmem %s0, %s172
      %p174 = pneg %p36
      %p175 = pneg %p33
      %p176 = pneg %p57
      %p177 = pneg %p54
      %p178 = pneg %p78
      %p179 = pneg %p75
      %p180 = pneg %p99
      %p181 = pneg %p96
      %p182 = pneg %p125
      %p183 = pneg %p122
      %s184 = smul.u32 2, %s15
      %p185 = scmp.lt.s32.totalorder %s184, 3
      %s186 = scalar_select %p185, %s184, 3
      %s187 = smul.addr %s186, 8
      %s188 = scalar_lea.vmem %s4, %s187
      %s189 = smul.u32 32, %s15
      %p190 = scmp.lt.s32.totalorder %s189, 63
      %s191 = scalar_select %p190, %s189, 63
      %s192 = smul.addr %s191, 8
      %s193 = scalar_lea.vmem %s0, %s192
      %s194 = smul.u32 32, %s15
      %s195 = smul.u32 2, %s15
      %p196 = scmp.lt.s32.totalorder %s195, 3
      %s197 = scalar_select %p196, %s195, 3
      %s198 = smul.addr %s197, 8
      %s199 = scalar_lea.vmem %s4, %s198
      %s200 = smul.u32 2, %s15
      %v202 = vld [vmem:[%s193] sm:$0xff]
      %v203 = vld [vmem:[%s193 + $0x8] sm:$0xff]
      %v204 = vld [vmem:[%s193 + $0x10] sm:$0xff]
      %v205 = vld [vmem:[%s193 + $0x18] sm:$0xff]
      %v206 = vld [vmem:[%s193 + $0x20] sm:$0xff]
      %v207 = vld [vmem:[%s193 + $0x28] sm:$0xff]
      %v208 = vld [vmem:[%s193 + $0x30] sm:$0xff]
      %v209 = vld [vmem:[%s193 + $0x38] sm:$0xff]
      %v210 = vld [vmem:[%s193 + $0x40] sm:$0xff]
      %v211 = vld [vmem:[%s193 + $0x48] sm:$0xff]
      %v212 = vld [vmem:[%s193 + $0x50] sm:$0xff]
      %v213 = vld [vmem:[%s193 + $0x58] sm:$0xff]
      %v214 = vld [vmem:[%s193 + $0x60] sm:$0xff]
      %v215 = vld [vmem:[%s193 + $0x68] sm:$0xff]
      %v216 = vld [vmem:[%s193 + $0x70] sm:$0xff]
      %v217 = vld [vmem:[%s193 + $0x78] sm:$0xff]
      %v218 = vld [vmem:[%s193 + $0x80] sm:$0xff]
      %v219 = vld [vmem:[%s193 + $0x88] sm:$0xff]
      %v220 = vld [vmem:[%s193 + $0x90] sm:$0xff]
      %v221 = vld [vmem:[%s193 + $0x98] sm:$0xff]
      %v222 = vld [vmem:[%s193 + $0xa0] sm:$0xff]
      %v223 = vld [vmem:[%s193 + $0xa8] sm:$0xff]
      %v224 = vld [vmem:[%s193 + $0xb0] sm:$0xff]
      %v225 = vld [vmem:[%s193 + $0xb8] sm:$0xff]
      %v226 = vld [vmem:[%s193 + $0xc0] sm:$0xff]
      %v227 = vld [vmem:[%s193 + $0xc8] sm:$0xff]
      %v228 = vld [vmem:[%s193 + $0xd0] sm:$0xff]
      %v229 = vld [vmem:[%s193 + $0xd8] sm:$0xff]
      %v230 = vld [vmem:[%s193 + $0xe0] sm:$0xff]
      %v231 = vld [vmem:[%s193 + $0xe8] sm:$0xff]
      %v232 = vld [vmem:[%s193 + $0xf0] sm:$0xff]
      %v233 = vld [vmem:[%s193 + $0xf8] sm:$0xff]
      %v234 = vlaneseq
      %v235 = vand.u32 %v234, 127
      %236 = vset.pattern.permute.xlu0 0
      %237 = vperm.xlu0 %236, %v202
      %v238 = vpop.permute.xlu0 %237
      %239 = vset.pattern.permute.xlu0 0
      %240 = vperm.xlu0 %239, %v203
      %v241 = vpop.permute.xlu0 %240
      %242 = vset.pattern.permute.xlu0 0
      %243 = vperm.xlu0 %242, %v204
      %v244 = vpop.permute.xlu0 %243
      %245 = vset.pattern.permute.xlu0 0
      %246 = vperm.xlu0 %245, %v205
      %v247 = vpop.permute.xlu0 %246
      %248 = vset.pattern.permute.xlu0 0
      %249 = vperm.xlu0 %248, %v206
      %v250 = vpop.permute.xlu0 %249
      %251 = vset.pattern.permute.xlu0 0
      %252 = vperm.xlu0 %251, %v207
      %v253 = vpop.permute.xlu0 %252
      %254 = vset.pattern.permute.xlu0 0
      %255 = vperm.xlu0 %254, %v208
      %v256 = vpop.permute.xlu0 %255
      %257 = vset.pattern.permute.xlu0 0
      %258 = vperm.xlu0 %257, %v209
      %v259 = vpop.permute.xlu0 %258
      %260 = vset.pattern.permute.xlu0 0
      %261 = vperm.xlu0 %260, %v210
      %v262 = vpop.permute.xlu0 %261
      %263 = vset.pattern.permute.xlu0 0
      %264 = vperm.xlu0 %263, %v211
      %v265 = vpop.permute.xlu0 %264
      %266 = vset.pattern.permute.xlu0 0
      %267 = vperm.xlu0 %266, %v212
      %v268 = vpop.permute.xlu0 %267
      %269 = vset.pattern.permute.xlu0 0
      %270 = vperm.xlu0 %269, %v213
      %v271 = vpop.permute.xlu0 %270
      %272 = vset.pattern.permute.xlu0 0
      %273 = vperm.xlu0 %272, %v214
      %v274 = vpop.permute.xlu0 %273
      %275 = vset.pattern.permute.xlu0 0
      %276 = vperm.xlu0 %275, %v215
      %v277 = vpop.permute.xlu0 %276
      %278 = vset.pattern.permute.xlu0 0
      %279 = vperm.xlu0 %278, %v216
      %v280 = vpop.permute.xlu0 %279
      %281 = vset.pattern.permute.xlu0 0
      %282 = vperm.xlu0 %281, %v217
      %v283 = vpop.permute.xlu0 %282
      %284 = vset.pattern.permute.xlu0 0
      %285 = vperm.xlu0 %284, %v218
      %v286 = vpop.permute.xlu0 %285
      %287 = vset.pattern.permute.xlu0 0
      %288 = vperm.xlu0 %287, %v219
      %v289 = vpop.permute.xlu0 %288
      %290 = vset.pattern.permute.xlu0 0
      %291 = vperm.xlu0 %290, %v220
      %v292 = vpop.permute.xlu0 %291
      %293 = vset.pattern.permute.xlu0 0
      %294 = vperm.xlu0 %293, %v221
      %v295 = vpop.permute.xlu0 %294
      %296 = vset.pattern.permute.xlu0 0
      %297 = vperm.xlu0 %296, %v222
      %v298 = vpop.permute.xlu0 %297
      %299 = vset.pattern.permute.xlu0 0
      %300 = vperm.xlu0 %299, %v223
      %v301 = vpop.permute.xlu0 %300
      %302 = vset.pattern.permute.xlu0 0
      %303 = vperm.xlu0 %302, %v224
      %v304 = vpop.permute.xlu0 %303
      %305 = vset.pattern.permute.xlu0 0
      %306 = vperm.xlu0 %305, %v225
      %v307 = vpop.permute.xlu0 %306
      %308 = vset.pattern.permute.xlu0 0
      %309 = vperm.xlu0 %308, %v226
      %v310 = vpop.permute.xlu0 %309
      %311 = vset.pattern.permute.xlu0 0
      %312 = vperm.xlu0 %311, %v227
      %v313 = vpop.permute.xlu0 %312
      %314 = vset.pattern.permute.xlu0 0
      %315 = vperm.xlu0 %314, %v228
      %v316 = vpop.permute.xlu0 %315
      %317 = vset.pattern.permute.xlu0 0
      %318 = vperm.xlu0 %317, %v229
      %v319 = vpop.permute.xlu0 %318
      %320 = vset.pattern.permute.xlu0 0
      %321 = vperm.xlu0 %320, %v230
      %v322 = vpop.permute.xlu0 %321
      %323 = vset.pattern.permute.xlu0 0
      %324 = vperm.xlu0 %323, %v231
      %v325 = vpop.permute.xlu0 %324
      %326 = vset.pattern.permute.xlu0 0
      %327 = vperm.xlu0 %326, %v232
      %v328 = vpop.permute.xlu0 %327
      %329 = vset.pattern.permute.xlu0 0
      %330 = vperm.xlu0 %329, %v233
      %v331 = vpop.permute.xlu0 %330
      %vm332 = vcmp.eq.s32.totalorder %v235, %v238
      %vm333 = vcmp.eq.s32.totalorder %v235, %v241
      %vm334 = vcmp.eq.s32.totalorder %v235, %v244
      %vm335 = vcmp.eq.s32.totalorder %v235, %v247
      %vm336 = vcmp.eq.s32.totalorder %v235, %v250
      %vm337 = vcmp.eq.s32.totalorder %v235, %v253
      %vm338 = vcmp.eq.s32.totalorder %v235, %v256
      %vm339 = vcmp.eq.s32.totalorder %v235, %v259
      %vm340 = vcmp.eq.s32.totalorder %v235, %v262
      %vm341 = vcmp.eq.s32.totalorder %v235, %v265
      %vm342 = vcmp.eq.s32.totalorder %v235, %v268
      %vm343 = vcmp.eq.s32.totalorder %v235, %v271
      %vm344 = vcmp.eq.s32.totalorder %v235, %v274
      %vm345 = vcmp.eq.s32.totalorder %v235, %v277
      %vm346 = vcmp.eq.s32.totalorder %v235, %v280
      %vm347 = vcmp.eq.s32.totalorder %v235, %v283
      %vm348 = vcmp.eq.s32.totalorder %v235, %v286
      %vm349 = vcmp.eq.s32.totalorder %v235, %v289
      %vm350 = vcmp.eq.s32.totalorder %v235, %v292
      %vm351 = vcmp.eq.s32.totalorder %v235, %v295
      %vm352 = vcmp.eq.s32.totalorder %v235, %v298
      %vm353 = vcmp.eq.s32.totalorder %v235, %v301
      %vm354 = vcmp.eq.s32.totalorder %v235, %v304
      %vm355 = vcmp.eq.s32.totalorder %v235, %v307
      %vm356 = vcmp.eq.s32.totalorder %v235, %v310
      %vm357 = vcmp.eq.s32.totalorder %v235, %v313
      %vm358 = vcmp.eq.s32.totalorder %v235, %v316
      %vm359 = vcmp.eq.s32.totalorder %v235, %v319
      %vm360 = vcmp.eq.s32.totalorder %v235, %v322
      %vm361 = vcmp.eq.s32.totalorder %v235, %v325
      %vm362 = vcmp.eq.s32.totalorder %v235, %v328
      %vm363 = vcmp.eq.s32.totalorder %v235, %v331
      %v364 = vsel %vm332, 1, 0
      %v365 = vsel %vm333, 1, 0
      %v366 = vsel %vm334, 1, 0
      %v367 = vsel %vm335, 1, 0
      %v368 = vsel %vm336, 1, 0
      %v369 = vsel %vm337, 1, 0
      %v370 = vsel %vm338, 1, 0
      %v371 = vsel %vm339, 1, 0
      %v372 = vsel %vm340, 1, 0
      %v373 = vsel %vm341, 1, 0
      %v374 = vsel %vm342, 1, 0
      %v375 = vsel %vm343, 1, 0
      %v376 = vsel %vm344, 1, 0
      %v377 = vsel %vm345, 1, 0
      %v378 = vsel %vm346, 1, 0
      %v379 = vsel %vm347, 1, 0
      %v380 = vsel %vm348, 1, 0
      %v381 = vsel %vm349, 1, 0
      %v382 = vsel %vm350, 1, 0
      %v383 = vsel %vm351, 1, 0
      %v384 = vsel %vm352, 1, 0
      %v385 = vsel %vm353, 1, 0
      %v386 = vsel %vm354, 1, 0
      %v387 = vsel %vm355, 1, 0
      %v388 = vsel %vm356, 1, 0
      %v389 = vsel %vm357, 1, 0
      %v390 = vsel %vm358, 1, 0
      %v391 = vsel %vm359, 1, 0
      %v392 = vsel %vm360, 1, 0
      %v393 = vsel %vm361, 1, 0
      %v394 = vsel %vm362, 1, 0
      %v395 = vsel %vm363, 1, 0
      %v396 = vcvt.s32.f32 %v364
      %v397 = vcvt.s32.f32 %v365
      %v398 = vcvt.s32.f32 %v366
      %v399 = vcvt.s32.f32 %v367
      %v400 = vcvt.s32.f32 %v368
      %v401 = vcvt.s32.f32 %v369
      %v402 = vcvt.s32.f32 %v370
      %v403 = vcvt.s32.f32 %v371
      %v404 = vcvt.s32.f32 %v372
      %v405 = vcvt.s32.f32 %v373
      %v406 = vcvt.s32.f32 %v374
      %v407 = vcvt.s32.f32 %v375
      %v408 = vcvt.s32.f32 %v376
      %v409 = vcvt.s32.f32 %v377
      %v410 = vcvt.s32.f32 %v378
      %v411 = vcvt.s32.f32 %v379
      %v412 = vcvt.s32.f32 %v380
      %v413 = vcvt.s32.f32 %v381
      %v414 = vcvt.s32.f32 %v382
      %v415 = vcvt.s32.f32 %v383
      %v416 = vcvt.s32.f32 %v384
      %v417 = vcvt.s32.f32 %v385
      %v418 = vcvt.s32.f32 %v386
      %v419 = vcvt.s32.f32 %v387
      %v420 = vcvt.s32.f32 %v388
      %v421 = vcvt.s32.f32 %v389
      %v422 = vcvt.s32.f32 %v390
      %v423 = vcvt.s32.f32 %v391
      %v424 = vcvt.s32.f32 %v392
      %v425 = vcvt.s32.f32 %v393
      %v426 = vcvt.s32.f32 %v394
      %v427 = vcvt.s32.f32 %v395
      %v428 = vld [vmem:[%s1] sm:$0xff]
      %v429 = vld [vmem:[%s1 + $0x8] sm:$0xff]
      %v430 = vld [vmem:[%s1 + $0x10] sm:$0xff]
      %v431 = vld [vmem:[%s1 + $0x18] sm:$0xff]
      %v432 = vld [vmem:[%s1 + $0x20] sm:$0xff]
      %v433 = vld [vmem:[%s1 + $0x28] sm:$0xff]
      %v434 = vld [vmem:[%s1 + $0x30] sm:$0xff]
      %v435 = vld [vmem:[%s1 + $0x38] sm:$0xff]
      %v436 = vld [vmem:[%s1 + $0x40] sm:$0xff]
      %v437 = vld [vmem:[%s1 + $0x48] sm:$0xff]
      %v438 = vld [vmem:[%s1 + $0x50] sm:$0xff]
      %v439 = vld [vmem:[%s1 + $0x58] sm:$0xff]
      %v440 = vld [vmem:[%s1 + $0x60] sm:$0xff]
      %v441 = vld [vmem:[%s1 + $0x68] sm:$0xff]
      %v442 = vld [vmem:[%s1 + $0x70] sm:$0xff]
      %v443 = vld [vmem:[%s1 + $0x78] sm:$0xff]
      %444 = vmatprep.subr.mxu0 0.0
      %445 = vmatpush1.msra.mxu0 %v428
      %446 = vmatprep.subr.mxu0 0.0
      %447 = vmatpush1.msra.mxu0 %v429
      %448 = vmatprep.subr.mxu0 0.0
      %449 = vmatpush1.msra.mxu0 %v430
      %450 = vmatprep.subr.mxu0 0.0
      %451 = vmatpush1.msra.mxu0 %v431
      %452 = vmatprep.subr.mxu0 0.0
      %453 = vmatpush1.msra.mxu0 %v432
      %454 = vmatprep.subr.mxu0 0.0
      %455 = vmatpush1.msra.mxu0 %v433
      %456 = vmatprep.subr.mxu0 0.0
      %457 = vmatpush1.msra.mxu0 %v434
      %458 = vmatprep.subr.mxu0 0.0
      %459 = vmatpush1.msra.mxu0 %v435
      %460 = vmatprep.subr.mxu0 0.0
      %461 = vmatpush1.msra.mxu0 %v436
      %462 = vmatprep.subr.mxu0 0.0
      %463 = vmatpush1.msra.mxu0 %v437
      %464 = vmatprep.subr.mxu0 0.0
      %465 = vmatpush1.msra.mxu0 %v438
      %466 = vmatprep.subr.mxu0 0.0
      %467 = vmatpush1.msra.mxu0 %v439
      %468 = vmatprep.subr.mxu0 0.0
      %469 = vmatpush1.msra.mxu0 %v440
      %470 = vmatprep.subr.mxu0 0.0
      %471 = vmatpush1.msra.mxu0 %v441
      %472 = vmatprep.subr.mxu0 0.0
      %473 = vmatpush1.msra.mxu0 %v442
      %474 = vmatprep.subr.mxu0 0.0
      %475 = vmatpush1.msra.mxu0 %v443
      %476 = vmatprep.subr.mxu0 0.0
      %477 = vmatpush1.msra.mxu0 0.0
      %478 = vmatprep.subr.mxu0 0.0
      %479 = vmatpush1.msra.mxu0 0.0
      %480 = vmatprep.subr.mxu0 0.0
      %481 = vmatpush1.msra.mxu0 0.0
      %482 = vmatprep.subr.mxu0 0.0
      %483 = vmatpush1.msra.mxu0 0.0
      %484 = vmatprep.subr.mxu0 0.0
      %485 = vmatpush1.msra.mxu0 0.0
      %486 = vmatprep.subr.mxu0 0.0
      %487 = vmatpush1.msra.mxu0 0.0
      %488 = vmatprep.subr.mxu0 0.0
      %489 = vmatpush1.msra.mxu0 0.0
      %490 = vmatprep.subr.mxu0 0.0
      %491 = vmatpush1.msra.mxu0 0.0
      %492 = vmatprep.subr.mxu0 0.0
      %493 = vmatpush1.msra.mxu0 0.0
      %494 = vmatprep.subr.mxu0 0.0
      %495 = vmatpush1.msra.mxu0 0.0
      %496 = vmatprep.subr.mxu0 0.0
      %497 = vmatpush1.msra.mxu0 0.0
      %498 = vmatprep.subr.mxu0 0.0
      %499 = vmatpush1.msra.mxu0 0.0
      %500 = vmatprep.subr.mxu0 0.0
      %501 = vmatpush1.msra.mxu0 0.0
      %502 = vmatprep.subr.mxu0 0.0
      %503 = vmatpush1.msra.mxu0 0.0
      %504 = vmatprep.subr.mxu0 0.0
      %505 = vmatpush1.msra.mxu0 0.0
      %506 = vmatprep.subr.mxu0 0.0
      %507 = vmatpush1.msra.mxu0 0.0
      %508 = vmatprep.mubr.f32.mxu0 0.0
      %509 = vmatmul.mubr.f32.gmra.mrb[0].mxu0 %v396
      %v510 = vpop.f32.mrb[0].mxu0
      %v511 = vadd.f32 0.0, %v510
      %v512 = vpop.f32.mrb[0].mxu0
      %513 = vmatprep.mubr.f32.mxu0 0.0
      %514 = vmatmul.mubr.f32.gmra.mrb[0].mxu0 %v397
      %v515 = vpop.f32.mrb[0].mxu0
      %v516 = vadd.f32 0.0, %v515
      %v517 = vpop.f32.mrb[0].mxu0
      %518 = vmatprep.mubr.f32.mxu0 0.0
      %519 = vmatmul.mubr.f32.gmra.mrb[0].mxu0 %v398
      %v520 = vpop.f32.mrb[0].mxu0
      %v521 = vadd.f32 0.0, %v520
      %v522 = vpop.f32.mrb[0].mxu0
      %523 = vmatprep.mubr.f32.mxu0 0.0
      %524 = vmatmul.mubr.f32.gmra.mrb[0].mxu0 %v399
      %v525 = vpop.f32.mrb[0].mxu0
      %v526 = vadd.f32 0.0, %v525
      %v527 = vpop.f32.mrb[0].mxu0
      %528 = vmatprep.mubr.f32.mxu0 0.0
      %529 = vmatmul.mubr.f32.gmra.mrb[0].mxu0 %v400
      %v530 = vpop.f32.mrb[0].mxu0
      %v531 = vadd.f32 0.0, %v530
      %v532 = vpop.f32.mrb[0].mxu0
      %533 = vmatprep.mubr.f32.mxu0 0.0
      %534 = vmatmul.mubr.f32.gmra.mrb[0].mxu0 %v401
      %v535 = vpop.f32.mrb[0].mxu0
      %v536 = vadd.f32 0.0, %v535
      %v537 = vpop.f32.mrb[0].mxu0
      %538 = vmatprep.mubr.f32.mxu0 0.0
      %539 = vmatmul.mubr.f32.gmra.mrb[0].mxu0 %v402
      %v540 = vpop.f32.mrb[0].mxu0
      %v541 = vadd.f32 0.0, %v540
      %v542 = vpop.f32.mrb[0].mxu0
      %543 = vmatprep.mubr.f32.mxu0 0.0
      %544 = vmatmul.mubr.f32.gmra.mrb[0].mxu0 %v403
      %v545 = vpop.f32.mrb[0].mxu0
      %v546 = vadd.f32 0.0, %v545
      %v547 = vpop.f32.mrb[0].mxu0
      %548 = vmatprep.mubr.f32.mxu0 0.0
      %549 = vmatmul.mubr.f32.gmra.mrb[0].mxu0 %v404
      %v550 = vpop.f32.mrb[0].mxu0
      %v551 = vadd.f32 0.0, %v550
      %v552 = vpop.f32.mrb[0].mxu0
      %553 = vmatprep.mubr.f32.mxu0 0.0
      %554 = vmatmul.mubr.f32.gmra.mrb[0].mxu0 %v405
      %v555 = vpop.f32.mrb[0].mxu0
      %v556 = vadd.f32 0.0, %v555
      %v557 = vpop.f32.mrb[0].mxu0
      %558 = vmatprep.mubr.f32.mxu0 0.0
      %559 = vmatmul.mubr.f32.gmra.mrb[0].mxu0 %v406
      %v560 = vpop.f32.mrb[0].mxu0
      %v561 = vadd.f32 0.0, %v560
      %v562 = vpop.f32.mrb[0].mxu0
      %563 = vmatprep.mubr.f32.mxu0 0.0
      %564 = vmatmul.mubr.f32.gmra.mrb[0].mxu0 %v407
      %v565 = vpop.f32.mrb[0].mxu0
      %v566 = vadd.f32 0.0, %v565
      %v567 = vpop.f32.mrb[0].mxu0
      %568 = vmatprep.mubr.f32.mxu0 0.0
      %569 = vmatmul.mubr.f32.gmra.mrb[0].mxu0 %v408
      %v570 = vpop.f32.mrb[0].mxu0
      %v571 = vadd.f32 0.0, %v570
      %v572 = vpop.f32.mrb[0].mxu0
      %573 = vmatprep.mubr.f32.mxu0 0.0
      %574 = vmatmul.mubr.f32.gmra.mrb[0].mxu0 %v409
      %v575 = vpop.f32.mrb[0].mxu0
      %v576 = vadd.f32 0.0, %v575
      %v577 = vpop.f32.mrb[0].mxu0
      %578 = vmatprep.mubr.f32.mxu0 0.0
      %579 = vmatmul.mubr.f32.gmra.mrb[0].mxu0 %v410
      %v580 = vpop.f32.mrb[0].mxu0
      %v581 = vadd.f32 0.0, %v580
      %v582 = vpop.f32.mrb[0].mxu0
      %583 = vmatprep.mubr.f32.mxu0 0.0
      %584 = vmatmul.mubr.f32.gmra.mrb[0].mxu0 %v411
      %v585 = vpop.f32.mrb[0].mxu0
      %v586 = vadd.f32 0.0, %v585
      %v587 = vpop.f32.mrb[0].mxu0
      %588 = vmatprep.mubr.f32.mxu0 0.0
      %589 = vmatmul.mubr.f32.gmra.mrb[0].mxu0 %v412
      %v590 = vpop.f32.mrb[0].mxu0
      %v591 = vadd.f32 0.0, %v590
      %v592 = vpop.f32.mrb[0].mxu0
      %593 = vmatprep.mubr.f32.mxu0 0.0
      %594 = vmatmul.mubr.f32.gmra.mrb[0].mxu0 %v413
      %v595 = vpop.f32.mrb[0].mxu0
      %v596 = vadd.f32 0.0, %v595
      %v597 = vpop.f32.mrb[0].mxu0
      %598 = vmatprep.mubr.f32.mxu0 0.0
      %599 = vmatmul.mubr.f32.gmra.mrb[0].mxu0 %v414
      %v600 = vpop.f32.mrb[0].mxu0
      %v601 = vadd.f32 0.0, %v600
      %v602 = vpop.f32.mrb[0].mxu0
      %603 = vmatprep.mubr.f32.mxu0 0.0
      %604 = vmatmul.mubr.f32.gmra.mrb[0].mxu0 %v415
      %v605 = vpop.f32.mrb[0].mxu0
      %v606 = vadd.f32 0.0, %v605
      %v607 = vpop.f32.mrb[0].mxu0
      %608 = vmatprep.mubr.f32.mxu0 0.0
      %609 = vmatmul.mubr.f32.gmra.mrb[0].mxu0 %v416
      %v610 = vpop.f32.mrb[0].mxu0
      %v611 = vadd.f32 0.0, %v610
      %v612 = vpop.f32.mrb[0].mxu0
      %613 = vmatprep.mubr.f32.mxu0 0.0
      %614 = vmatmul.mubr.f32.gmra.mrb[0].mxu0 %v417
      %v615 = vpop.f32.mrb[0].mxu0
      %v616 = vadd.f32 0.0, %v615
      %v617 = vpop.f32.mrb[0].mxu0
      %618 = vmatprep.mubr.f32.mxu0 0.0
      %619 = vmatmul.mubr.f32.gmra.mrb[0].mxu0 %v418
      %v620 = vpop.f32.mrb[0].mxu0
      %v621 = vadd.f32 0.0, %v620
      %v622 = vpop.f32.mrb[0].mxu0
      %623 = vmatprep.mubr.f32.mxu0 0.0
      %624 = vmatmul.mubr.f32.gmra.mrb[0].mxu0 %v419
      %v625 = vpop.f32.mrb[0].mxu0
      %v626 = vadd.f32 0.0, %v625
      %v627 = vpop.f32.mrb[0].mxu0
      %628 = vmatprep.mubr.f32.mxu0 0.0
      %629 = vmatmul.mubr.f32.gmra.mrb[0].mxu0 %v420
      %v630 = vpop.f32.mrb[0].mxu0
      %v631 = vadd.f32 0.0, %v630
      %v632 = vpop.f32.mrb[0].mxu0
      %633 = vmatprep.mubr.f32.mxu0 0.0
      %634 = vmatmul.mubr.f32.gmra.mrb[0].mxu0 %v421
      %v635 = vpop.f32.mrb[0].mxu0
      %v636 = vadd.f32 0.0, %v635
      %v637 = vpop.f32.mrb[0].mxu0
      %638 = vmatprep.mubr.f32.mxu0 0.0
      %639 = vmatmul.mubr.f32.gmra.mrb[0].mxu0 %v422
      %v640 = vpop.f32.mrb[0].mxu0
      %v641 = vadd.f32 0.0, %v640
      %v642 = vpop.f32.mrb[0].mxu0
      %643 = vmatprep.mubr.f32.mxu0 0.0
      %644 = vmatmul.mubr.f32.gmra.mrb[0].mxu0 %v423
      %v645 = vpop.f32.mrb[0].mxu0
      %v646 = vadd.f32 0.0, %v645
      %v647 = vpop.f32.mrb[0].mxu0
      %648 = vmatprep.mubr.f32.mxu0 0.0
      %649 = vmatmul.mubr.f32.gmra.mrb[0].mxu0 %v424
      %v650 = vpop.f32.mrb[0].mxu0
      %v651 = vadd.f32 0.0, %v650
      %v652 = vpop.f32.mrb[0].mxu0
      %653 = vmatprep.mubr.f32.mxu0 0.0
      %654 = vmatmul.mubr.f32.gmra.mrb[0].mxu0 %v425
      %v655 = vpop.f32.mrb[0].mxu0
      %v656 = vadd.f32 0.0, %v655
      %v657 = vpop.f32.mrb[0].mxu0
      %658 = vmatprep.mubr.f32.mxu0 0.0
      %659 = vmatmul.mubr.f32.gmra.mrb[0].mxu0 %v426
      %v660 = vpop.f32.mrb[0].mxu0
      %v661 = vadd.f32 0.0, %v660
      %v662 = vpop.f32.mrb[0].mxu0
      %663 = vmatprep.mubr.f32.mxu0 0.0
      %664 = vmatmul.mubr.f32.gmra.mrb[0].mxu0 %v427
      %v665 = vpop.f32.mrb[0].mxu0
      %v666 = vadd.f32 0.0, %v665
      %v667 = vpop.f32.mrb[0].mxu0
      %668 = vdwg.mxu0
      %v669 = vpack.c.bf16 %v516, %v511
      %v670 = vpack.c.bf16 %v526, %v521
      %v671 = vpack.c.bf16 %v536, %v531
      %v672 = vpack.c.bf16 %v546, %v541
      %v673 = vpack.c.bf16 %v556, %v551
      %v674 = vpack.c.bf16 %v566, %v561
      %v675 = vpack.c.bf16 %v576, %v571
      %v676 = vpack.c.bf16 %v586, %v581
      %v677 = vpack.c.bf16 %v596, %v591
      %v678 = vpack.c.bf16 %v606, %v601
      %v679 = vpack.c.bf16 %v616, %v611
      %v680 = vpack.c.bf16 %v626, %v621
      %v681 = vpack.c.bf16 %v636, %v631
      %v682 = vpack.c.bf16 %v646, %v641
      %v683 = vpack.c.bf16 %v656, %v651
      %v684 = vpack.c.bf16 %v666, %v661
      %v685 = vld [vmem:[%s2] sm:$0xf]
      %v686 = vld [vmem:[%s2 + $0x4] sm:$0xf]
      %v687 = vld [vmem:[%s2 + $0x8] sm:$0xf]
      %v688 = vld [vmem:[%s2 + $0xc] sm:$0xf]
      %vm722 = vcmask 1046528
      %v723 = vrot.slane %v511, 1
      %v724 = vrot.slane %v516, 1
      %v725 = vsel %vm722, %v723, %v724
      %v726 = vrot.slane 0.0, 1
      %v727 = vsel %vm722, %v724, %v726
      %v728 = vrot.slane %v521, 1
      %v729 = vrot.slane %v526, 1
      %v730 = vsel %vm722, %v728, %v729
      %v731 = vsel %vm722, %v729, %v726
      %v732 = vrot.slane %v531, 1
      %v733 = vrot.slane %v536, 1
      %v734 = vsel %vm722, %v732, %v733
      %v735 = vsel %vm722, %v733, %v726
      %v736 = vrot.slane %v541, 1
      %v737 = vrot.slane %v546, 1
      %v738 = vsel %vm722, %v736, %v737
      %v739 = vsel %vm722, %v737, %v726
      %v740 = vrot.slane %v551, 1
      %v741 = vrot.slane %v556, 1
      %v742 = vsel %vm722, %v740, %v741
      %v743 = vsel %vm722, %v741, %v726
      %v744 = vrot.slane %v561, 1
      %v745 = vrot.slane %v566, 1
      %v746 = vsel %vm722, %v744, %v745
      %v747 = vsel %vm722, %v745, %v726
      %v748 = vrot.slane %v571, 1
      %v749 = vrot.slane %v576, 1
      %v750 = vsel %vm722, %v748, %v749
      %v751 = vsel %vm722, %v749, %v726
      %v752 = vrot.slane %v581, 1
      %v753 = vrot.slane %v586, 1
      %v754 = vsel %vm722, %v752, %v753
      %v755 = vsel %vm722, %v753, %v726
      %v756 = vrot.slane %v591, 1
      %v757 = vrot.slane %v596, 1
      %v758 = vsel %vm722, %v756, %v757
      %v759 = vsel %vm722, %v757, %v726
      %v760 = vrot.slane %v601, 1
      %v761 = vrot.slane %v606, 1
      %v762 = vsel %vm722, %v760, %v761
      %v763 = vsel %vm722, %v761, %v726
      %v764 = vrot.slane %v611, 1
      %v765 = vrot.slane %v616, 1
      %v766 = vsel %vm722, %v764, %v765
      %v767 = vsel %vm722, %v765, %v726
      %v768 = vrot.slane %v621, 1
      %v769 = vrot.slane %v626, 1
      %v770 = vsel %vm722, %v768, %v769
      %v771 = vsel %vm722, %v769, %v726
      %v772 = vrot.slane %v631, 1
      %v773 = vrot.slane %v636, 1
      %v774 = vsel %vm722, %v772, %v773
      %v775 = vsel %vm722, %v773, %v726
      %v776 = vrot.slane %v641, 1
      %v777 = vrot.slane %v646, 1
      %v778 = vsel %vm722, %v776, %v777
      %v779 = vsel %vm722, %v777, %v726
      %v780 = vrot.slane %v651, 1
      %v781 = vrot.slane %v656, 1
      %v782 = vsel %vm722, %v780, %v781
      %v783 = vsel %vm722, %v781, %v726
      %v784 = vrot.slane %v661, 1
      %v785 = vrot.slane %v666, 1
      %v786 = vsel %vm722, %v784, %v785
      %v787 = vsel %vm722, %v785, %v726
      %v820 = vpack.c.bf16 %v727, %v725
      %v821 = vpack.c.bf16 %v731, %v730
      %v822 = vpack.c.bf16 %v735, %v734
      %v823 = vpack.c.bf16 %v739, %v738
      %v824 = vpack.c.bf16 %v743, %v742
      %v825 = vpack.c.bf16 %v747, %v746
      %v826 = vpack.c.bf16 %v751, %v750
      %v827 = vpack.c.bf16 %v755, %v754
      %v828 = vpack.c.bf16 %v759, %v758
      %v829 = vpack.c.bf16 %v763, %v762
      %v830 = vpack.c.bf16 %v767, %v766
      %v831 = vpack.c.bf16 %v771, %v770
      %v832 = vpack.c.bf16 %v775, %v774
      %v833 = vpack.c.bf16 %v779, %v778
      %v834 = vpack.c.bf16 %v783, %v782
      %v835 = vpack.c.bf16 %v787, %v786
      %v836 = vld [vmem:[%s2 + $0x10] sm:$0xf]
      %v837 = vld [vmem:[%s2 + $0x14] sm:$0xf]
      %v838 = vld [vmem:[%s2 + $0x18] sm:$0xf]
      %v839 = vld [vmem:[%s2 + $0x1c] sm:$0xf]
      %v844 = vunpack.c.l.b16 %v836
      %v845 = vunpack.c.l.b16 %v837
      %v846 = vunpack.c.l.b16 %v838
      %v847 = vunpack.c.l.b16 %v839
      %v848 = vpack.c.b16 %v845, %v844
      %v849 = vpack.c.b16 %v847, %v846
      %vm852 = vcmask 261120
      %v854 = vsel %vm852, %v820, 0
      %v857 = vsel %vm852, %v821, 0
      %v860 = vsel %vm852, %v822, 0
      %v863 = vsel %vm852, %v823, 0
      %v866 = vsel %vm852, %v824, 0
      %v869 = vsel %vm852, %v825, 0
      %v872 = vsel %vm852, %v826, 0
      %v875 = vsel %vm852, %v827, 0
      %v878 = vsel %vm852, %v828, 0
      %v881 = vsel %vm852, %v829, 0
      %v884 = vsel %vm852, %v830, 0
      %v887 = vsel %vm852, %v831, 0
      %v890 = vsel %vm852, %v832, 0
      %v893 = vsel %vm852, %v833, 0
      %v896 = vsel %vm852, %v834, 0
      %v899 = vsel %vm852, %v835, 0
      %901 = vmatprep.subr.bf16.mxu0 0
      %902 = vmatpush1.bf16.msra.mxu0 %v848
      %903 = vmatprep.subr.bf16.mxu0 0
      %904 = vmatpush1.bf16.msra.mxu0 %v849
      %905 = vmatprep.subr.bf16.mxu0 0
      %906 = vmatpush1.bf16.msra.mxu0 0
      %907 = vmatprep.subr.bf16.mxu0 0
      %908 = vmatpush1.bf16.msra.mxu0 0
      %909 = vmatprep.subr.bf16.mxu0 0
      %910 = vmatpush1.bf16.msra.mxu0 0
      %911 = vmatprep.subr.bf16.mxu0 0
      %912 = vmatpush1.bf16.msra.mxu0 0
      %913 = vmatprep.subr.bf16.mxu0 0
      %914 = vmatpush1.bf16.msra.mxu0 0
      %915 = vmatprep.subr.bf16.mxu0 0
      %916 = vmatpush1.bf16.msra.mxu0 0
      %917 = vmatprep.subr.bf16.mxu0 0
      %918 = vmatpush1.bf16.msra.mxu0 0
      %919 = vmatprep.subr.bf16.mxu0 0
      %920 = vmatpush1.bf16.msra.mxu0 0
      %921 = vmatprep.subr.bf16.mxu0 0
      %922 = vmatpush1.bf16.msra.mxu0 0
      %923 = vmatprep.subr.bf16.mxu0 0
      %924 = vmatpush1.bf16.msra.mxu0 0
      %925 = vmatprep.subr.bf16.mxu0 0
      %926 = vmatpush1.bf16.msra.mxu0 0
      %927 = vmatprep.subr.bf16.mxu0 0
      %928 = vmatpush1.bf16.msra.mxu0 0
      %929 = vmatprep.subr.bf16.mxu0 0
      %930 = vmatpush1.bf16.msra.mxu0 0
      %931 = vmatprep.subr.bf16.mxu0 0
      %932 = vmatpush1.bf16.msra.mxu0 0
      %933 = vmatprep.mubr.bf16.mxu0 0
      %934 = vmatmul.mubr.bf16.gmra.mrb[0].mxu0 %v854
      %v935 = vpop.f32.mrb[0].mxu0
      %v936 = vadd.f32 0.0, %v935
      %v937 = vpop.f32.mrb[0].mxu0
      %v938 = vpop.f32.mrb[0].mxu0
      %v939 = vadd.f32 0.0, %v938
      %v940 = vpop.f32.mrb[0].mxu0
      %941 = vmatprep.mubr.bf16.mxu0 0
      %942 = vmatmul.mubr.bf16.gmra.mrb[0].mxu0 %v857
      %v943 = vpop.f32.mrb[0].mxu0
      %v944 = vadd.f32 0.0, %v943
      %v945 = vpop.f32.mrb[0].mxu0
      %v946 = vpop.f32.mrb[0].mxu0
      %v947 = vadd.f32 0.0, %v946
      %v948 = vpop.f32.mrb[0].mxu0
      %949 = vmatprep.mubr.bf16.mxu0 0
      %950 = vmatmul.mubr.bf16.gmra.mrb[0].mxu0 %v860
      %v951 = vpop.f32.mrb[0].mxu0
      %v952 = vadd.f32 0.0, %v951
      %v953 = vpop.f32.mrb[0].mxu0
      %v954 = vpop.f32.mrb[0].mxu0
      %v955 = vadd.f32 0.0, %v954
      %v956 = vpop.f32.mrb[0].mxu0
      %957 = vmatprep.mubr.bf16.mxu0 0
      %958 = vmatmul.mubr.bf16.gmra.mrb[0].mxu0 %v863
      %v959 = vpop.f32.mrb[0].mxu0
      %v960 = vadd.f32 0.0, %v959
      %v961 = vpop.f32.mrb[0].mxu0
      %v962 = vpop.f32.mrb[0].mxu0
      %v963 = vadd.f32 0.0, %v962
      %v964 = vpop.f32.mrb[0].mxu0
      %965 = vmatprep.mubr.bf16.mxu0 0
      %966 = vmatmul.mubr.bf16.gmra.mrb[0].mxu0 %v866
      %v967 = vpop.f32.mrb[0].mxu0
      %v968 = vadd.f32 0.0, %v967
      %v969 = vpop.f32.mrb[0].mxu0
      %v970 = vpop.f32.mrb[0].mxu0
      %v971 = vadd.f32 0.0, %v970
      %v972 = vpop.f32.mrb[0].mxu0
      %973 = vmatprep.mubr.bf16.mxu0 0
      %974 = vmatmul.mubr.bf16.gmra.mrb[0].mxu0 %v869
      %v975 = vpop.f32.mrb[0].mxu0
      %v976 = vadd.f32 0.0, %v975
      %v977 = vpop.f32.mrb[0].mxu0
      %v978 = vpop.f32.mrb[0].mxu0
      %v979 = vadd.f32 0.0, %v978
      %v980 = vpop.f32.mrb[0].mxu0
      %981 = vmatprep.mubr.bf16.mxu0 0
      %982 = vmatmul.mubr.bf16.gmra.mrb[0].mxu0 %v872
      %v983 = vpop.f32.mrb[0].mxu0
      %v984 = vadd.f32 0.0, %v983
      %v985 = vpop.f32.mrb[0].mxu0
      %v986 = vpop.f32.mrb[0].mxu0
      %v987 = vadd.f32 0.0, %v986
      %v988 = vpop.f32.mrb[0].mxu0
      %989 = vmatprep.mubr.bf16.mxu0 0
      %990 = vmatmul.mubr.bf16.gmra.mrb[0].mxu0 %v875
      %v991 = vpop.f32.mrb[0].mxu0
      %v992 = vadd.f32 0.0, %v991
      %v993 = vpop.f32.mrb[0].mxu0
      %v994 = vpop.f32.mrb[0].mxu0
      %v995 = vadd.f32 0.0, %v994
      %v996 = vpop.f32.mrb[0].mxu0
      %997 = vmatprep.mubr.bf16.mxu0 0
      %998 = vmatmul.mubr.bf16.gmra.mrb[0].mxu0 %v878
      %v999 = vpop.f32.mrb[0].mxu0
      %v1000 = vadd.f32 0.0, %v999
      %v1001 = vpop.f32.mrb[0].mxu0
      %v1002 = vpop.f32.mrb[0].mxu0
      %v1003 = vadd.f32 0.0, %v1002
      %v1004 = vpop.f32.mrb[0].mxu0
      %1005 = vmatprep.mubr.bf16.mxu0 0
      %1006 = vmatmul.mubr.bf16.gmra.mrb[0].mxu0 %v881
      %v1007 = vpop.f32.mrb[0].mxu0
      %v1008 = vadd.f32 0.0, %v1007
      %v1009 = vpop.f32.mrb[0].mxu0
      %v1010 = vpop.f32.mrb[0].mxu0
      %v1011 = vadd.f32 0.0, %v1010
      %v1012 = vpop.f32.mrb[0].mxu0
      %1013 = vmatprep.mubr.bf16.mxu0 0
      %1014 = vmatmul.mubr.bf16.gmra.mrb[0].mxu0 %v884
      %v1015 = vpop.f32.mrb[0].mxu0
      %v1016 = vadd.f32 0.0, %v1015
      %v1017 = vpop.f32.mrb[0].mxu0
      %v1018 = vpop.f32.mrb[0].mxu0
      %v1019 = vadd.f32 0.0, %v1018
      %v1020 = vpop.f32.mrb[0].mxu0
      %1021 = vmatprep.mubr.bf16.mxu0 0
      %1022 = vmatmul.mubr.bf16.gmra.mrb[0].mxu0 %v887
      %v1023 = vpop.f32.mrb[0].mxu0
      %v1024 = vadd.f32 0.0, %v1023
      %v1025 = vpop.f32.mrb[0].mxu0
      %v1026 = vpop.f32.mrb[0].mxu0
      %v1027 = vadd.f32 0.0, %v1026
      %v1028 = vpop.f32.mrb[0].mxu0
      %1029 = vmatprep.mubr.bf16.mxu0 0
      %1030 = vmatmul.mubr.bf16.gmra.mrb[0].mxu0 %v890
      %v1031 = vpop.f32.mrb[0].mxu0
      %v1032 = vadd.f32 0.0, %v1031
      %v1033 = vpop.f32.mrb[0].mxu0
      %v1034 = vpop.f32.mrb[0].mxu0
      %v1035 = vadd.f32 0.0, %v1034
      %v1036 = vpop.f32.mrb[0].mxu0
      %1037 = vmatprep.mubr.bf16.mxu0 0
      %1038 = vmatmul.mubr.bf16.gmra.mrb[0].mxu0 %v893
      %v1039 = vpop.f32.mrb[0].mxu0
      %v1040 = vadd.f32 0.0, %v1039
      %v1041 = vpop.f32.mrb[0].mxu0
      %v1042 = vpop.f32.mrb[0].mxu0
      %v1043 = vadd.f32 0.0, %v1042
      %v1044 = vpop.f32.mrb[0].mxu0
      %1045 = vmatprep.mubr.bf16.mxu0 0
      %1046 = vmatmul.mubr.bf16.gmra.mrb[0].mxu0 %v896
      %v1047 = vpop.f32.mrb[0].mxu0
      %v1048 = vadd.f32 0.0, %v1047
      %v1049 = vpop.f32.mrb[0].mxu0
      %v1050 = vpop.f32.mrb[0].mxu0
      %v1051 = vadd.f32 0.0, %v1050
      %v1052 = vpop.f32.mrb[0].mxu0
      %1053 = vmatprep.mubr.bf16.mxu0 0
      %1054 = vmatmul.mubr.bf16.gmra.mrb[0].mxu0 %v899
      %v1055 = vpop.f32.mrb[0].mxu0
      %v1056 = vadd.f32 0.0, %v1055
      %v1057 = vpop.f32.mrb[0].mxu0
      %v1058 = vpop.f32.mrb[0].mxu0
      %v1059 = vadd.f32 0.0, %v1058
      %v1060 = vpop.f32.mrb[0].mxu0
      %1061 = vdwg.mxu0
      %v1066 = vunpack.c.l.b16 %v685
      %v1067 = vunpack.c.l.b16 %v686
      %v1068 = vunpack.c.l.b16 %v687
      %v1069 = vunpack.c.l.b16 %v688
      %v1070 = vpack.c.b16 %v1067, %v1066
      %v1071 = vpack.c.b16 %v1069, %v1068
      %v1075 = vsel %vm852, %v669, 0
      %v1078 = vsel %vm852, %v670, 0
      %v1081 = vsel %vm852, %v671, 0
      %v1084 = vsel %vm852, %v672, 0
      %v1087 = vsel %vm852, %v673, 0
      %v1090 = vsel %vm852, %v674, 0
      %v1093 = vsel %vm852, %v675, 0
      %v1096 = vsel %vm852, %v676, 0
      %v1099 = vsel %vm852, %v677, 0
      %v1102 = vsel %vm852, %v678, 0
      %v1105 = vsel %vm852, %v679, 0
      %v1108 = vsel %vm852, %v680, 0
      %v1111 = vsel %vm852, %v681, 0
      %v1114 = vsel %vm852, %v682, 0
      %v1117 = vsel %vm852, %v683, 0
      %v1120 = vsel %vm852, %v684, 0
      %1122 = vmatprep.subr.bf16.mxu0 0
      %1123 = vmatpush1.bf16.msra.mxu0 %v1070
      %1124 = vmatprep.subr.bf16.mxu0 0
      %1125 = vmatpush1.bf16.msra.mxu0 %v1071
      %1126 = vmatprep.subr.bf16.mxu0 0
      %1127 = vmatpush1.bf16.msra.mxu0 0
      %1128 = vmatprep.subr.bf16.mxu0 0
      %1129 = vmatpush1.bf16.msra.mxu0 0
      %1130 = vmatprep.subr.bf16.mxu0 0
      %1131 = vmatpush1.bf16.msra.mxu0 0
      %1132 = vmatprep.subr.bf16.mxu0 0
      %1133 = vmatpush1.bf16.msra.mxu0 0
      %1134 = vmatprep.subr.bf16.mxu0 0
      %1135 = vmatpush1.bf16.msra.mxu0 0
      %1136 = vmatprep.subr.bf16.mxu0 0
      %1137 = vmatpush1.bf16.msra.mxu0 0
      %1138 = vmatprep.subr.bf16.mxu0 0
      %1139 = vmatpush1.bf16.msra.mxu0 0
      %1140 = vmatprep.subr.bf16.mxu0 0
      %1141 = vmatpush1.bf16.msra.mxu0 0
      %1142 = vmatprep.subr.bf16.mxu0 0
      %1143 = vmatpush1.bf16.msra.mxu0 0
      %1144 = vmatprep.subr.bf16.mxu0 0
      %1145 = vmatpush1.bf16.msra.mxu0 0
      %1146 = vmatprep.subr.bf16.mxu0 0
      %1147 = vmatpush1.bf16.msra.mxu0 0
      %1148 = vmatprep.subr.bf16.mxu0 0
      %1149 = vmatpush1.bf16.msra.mxu0 0
      %1150 = vmatprep.subr.bf16.mxu0 0
      %1151 = vmatpush1.bf16.msra.mxu0 0
      %1152 = vmatprep.subr.bf16.mxu0 0
      %1153 = vmatpush1.bf16.msra.mxu0 0
      %1154 = vmatprep.mubr.bf16.mxu0 0
      %1155 = vmatmul.mubr.bf16.gmra.mrb[0].mxu0 %v1075
      %v1156 = vpop.f32.mrb[0].mxu0
      %v1157 = vadd.f32 %v936, %v1156
      %v1158 = vpop.f32.mrb[0].mxu0
      %v1159 = vpop.f32.mrb[0].mxu0
      %v1160 = vadd.f32 %v939, %v1159
      %v1161 = vpop.f32.mrb[0].mxu0
      %1162 = vmatprep.mubr.bf16.mxu0 0
      %1163 = vmatmul.mubr.bf16.gmra.mrb[0].mxu0 %v1078
      %v1164 = vpop.f32.mrb[0].mxu0
      %v1165 = vadd.f32 %v944, %v1164
      %v1166 = vpop.f32.mrb[0].mxu0
      %v1167 = vpop.f32.mrb[0].mxu0
      %v1168 = vadd.f32 %v947, %v1167
      %v1169 = vpop.f32.mrb[0].mxu0
      %1170 = vmatprep.mubr.bf16.mxu0 0
      %1171 = vmatmul.mubr.bf16.gmra.mrb[0].mxu0 %v1081
      %v1172 = vpop.f32.mrb[0].mxu0
      %v1173 = vadd.f32 %v952, %v1172
      %v1174 = vpop.f32.mrb[0].mxu0
      %v1175 = vpop.f32.mrb[0].mxu0
      %v1176 = vadd.f32 %v955, %v1175
      %v1177 = vpop.f32.mrb[0].mxu0
      %1178 = vmatprep.mubr.bf16.mxu0 0
      %1179 = vmatmul.mubr.bf16.gmra.mrb[0].mxu0 %v1084
      %v1180 = vpop.f32.mrb[0].mxu0
      %v1181 = vadd.f32 %v960, %v1180
      %v1182 = vpop.f32.mrb[0].mxu0
      %v1183 = vpop.f32.mrb[0].mxu0
      %v1184 = vadd.f32 %v963, %v1183
      %v1185 = vpop.f32.mrb[0].mxu0
      %1186 = vmatprep.mubr.bf16.mxu0 0
      %1187 = vmatmul.mubr.bf16.gmra.mrb[0].mxu0 %v1087
      %v1188 = vpop.f32.mrb[0].mxu0
      %v1189 = vadd.f32 %v968, %v1188
      %v1190 = vpop.f32.mrb[0].mxu0
      %v1191 = vpop.f32.mrb[0].mxu0
      %v1192 = vadd.f32 %v971, %v1191
      %v1193 = vpop.f32.mrb[0].mxu0
      %1194 = vmatprep.mubr.bf16.mxu0 0
      %1195 = vmatmul.mubr.bf16.gmra.mrb[0].mxu0 %v1090
      %v1196 = vpop.f32.mrb[0].mxu0
      %v1197 = vadd.f32 %v976, %v1196
      %v1198 = vpop.f32.mrb[0].mxu0
      %v1199 = vpop.f32.mrb[0].mxu0
      %v1200 = vadd.f32 %v979, %v1199
      %v1201 = vpop.f32.mrb[0].mxu0
      %1202 = vmatprep.mubr.bf16.mxu0 0
      %1203 = vmatmul.mubr.bf16.gmra.mrb[0].mxu0 %v1093
      %v1204 = vpop.f32.mrb[0].mxu0
      %v1205 = vadd.f32 %v984, %v1204
      %v1206 = vpop.f32.mrb[0].mxu0
      %v1207 = vpop.f32.mrb[0].mxu0
      %v1208 = vadd.f32 %v987, %v1207
      %v1209 = vpop.f32.mrb[0].mxu0
      %1210 = vmatprep.mubr.bf16.mxu0 0
      %1211 = vmatmul.mubr.bf16.gmra.mrb[0].mxu0 %v1096
      %v1212 = vpop.f32.mrb[0].mxu0
      %v1213 = vadd.f32 %v992, %v1212
      %v1214 = vpop.f32.mrb[0].mxu0
      %v1215 = vpop.f32.mrb[0].mxu0
      %v1216 = vadd.f32 %v995, %v1215
      %v1217 = vpop.f32.mrb[0].mxu0
      %1218 = vmatprep.mubr.bf16.mxu0 0
      %1219 = vmatmul.mubr.bf16.gmra.mrb[0].mxu0 %v1099
      %v1220 = vpop.f32.mrb[0].mxu0
      %v1221 = vadd.f32 %v1000, %v1220
      %v1222 = vpop.f32.mrb[0].mxu0
      %v1223 = vpop.f32.mrb[0].mxu0
      %v1224 = vadd.f32 %v1003, %v1223
      %v1225 = vpop.f32.mrb[0].mxu0
      %1226 = vmatprep.mubr.bf16.mxu0 0
      %1227 = vmatmul.mubr.bf16.gmra.mrb[0].mxu0 %v1102
      %v1228 = vpop.f32.mrb[0].mxu0
      %v1229 = vadd.f32 %v1008, %v1228
      %v1230 = vpop.f32.mrb[0].mxu0
      %v1231 = vpop.f32.mrb[0].mxu0
      %v1232 = vadd.f32 %v1011, %v1231
      %v1233 = vpop.f32.mrb[0].mxu0
      %1234 = vmatprep.mubr.bf16.mxu0 0
      %1235 = vmatmul.mubr.bf16.gmra.mrb[0].mxu0 %v1105
      %v1236 = vpop.f32.mrb[0].mxu0
      %v1237 = vadd.f32 %v1016, %v1236
      %v1238 = vpop.f32.mrb[0].mxu0
      %v1239 = vpop.f32.mrb[0].mxu0
      %v1240 = vadd.f32 %v1019, %v1239
      %v1241 = vpop.f32.mrb[0].mxu0
      %1242 = vmatprep.mubr.bf16.mxu0 0
      %1243 = vmatmul.mubr.bf16.gmra.mrb[0].mxu0 %v1108
      %v1244 = vpop.f32.mrb[0].mxu0
      %v1245 = vadd.f32 %v1024, %v1244
      %v1246 = vpop.f32.mrb[0].mxu0
      %v1247 = vpop.f32.mrb[0].mxu0
      %v1248 = vadd.f32 %v1027, %v1247
      %v1249 = vpop.f32.mrb[0].mxu0
      %1250 = vmatprep.mubr.bf16.mxu0 0
      %1251 = vmatmul.mubr.bf16.gmra.mrb[0].mxu0 %v1111
      %v1252 = vpop.f32.mrb[0].mxu0
      %v1253 = vadd.f32 %v1032, %v1252
      %v1254 = vpop.f32.mrb[0].mxu0
      %v1255 = vpop.f32.mrb[0].mxu0
      %v1256 = vadd.f32 %v1035, %v1255
      %v1257 = vpop.f32.mrb[0].mxu0
      %1258 = vmatprep.mubr.bf16.mxu0 0
      %1259 = vmatmul.mubr.bf16.gmra.mrb[0].mxu0 %v1114
      %v1260 = vpop.f32.mrb[0].mxu0
      %v1261 = vadd.f32 %v1040, %v1260
      %v1262 = vpop.f32.mrb[0].mxu0
      %v1263 = vpop.f32.mrb[0].mxu0
      %v1264 = vadd.f32 %v1043, %v1263
      %v1265 = vpop.f32.mrb[0].mxu0
      %1266 = vmatprep.mubr.bf16.mxu0 0
      %1267 = vmatmul.mubr.bf16.gmra.mrb[0].mxu0 %v1117
      %v1268 = vpop.f32.mrb[0].mxu0
      %v1269 = vadd.f32 %v1048, %v1268
      %v1270 = vpop.f32.mrb[0].mxu0
      %v1271 = vpop.f32.mrb[0].mxu0
      %v1272 = vadd.f32 %v1051, %v1271
      %v1273 = vpop.f32.mrb[0].mxu0
      %1274 = vmatprep.mubr.bf16.mxu0 0
      %1275 = vmatmul.mubr.bf16.gmra.mrb[0].mxu0 %v1120
      %v1276 = vpop.f32.mrb[0].mxu0
      %v1277 = vadd.f32 %v1056, %v1276
      %v1278 = vpop.f32.mrb[0].mxu0
      %v1279 = vpop.f32.mrb[0].mxu0
      %v1280 = vadd.f32 %v1059, %v1279
      %v1281 = vpop.f32.mrb[0].mxu0
      %1282 = vdwg.mxu0
      %vm1283 = vcmask 1045504
      %v1284 = vrot.slane %v511, 2
      %v1285 = vrot.slane %v516, 2
      %v1286 = vsel %vm1283, %v1284, %v1285
      %v1287 = vrot.slane 0.0, 2
      %v1288 = vsel %vm1283, %v1285, %v1287
      %v1289 = vrot.slane %v521, 2
      %v1290 = vrot.slane %v526, 2
      %v1291 = vsel %vm1283, %v1289, %v1290
      %v1292 = vsel %vm1283, %v1290, %v1287
      %v1293 = vrot.slane %v531, 2
      %v1294 = vrot.slane %v536, 2
      %v1295 = vsel %vm1283, %v1293, %v1294
      %v1296 = vsel %vm1283, %v1294, %v1287
      %v1297 = vrot.slane %v541, 2
      %v1298 = vrot.slane %v546, 2
      %v1299 = vsel %vm1283, %v1297, %v1298
      %v1300 = vsel %vm1283, %v1298, %v1287
      %v1301 = vrot.slane %v551, 2
      %v1302 = vrot.slane %v556, 2
      %v1303 = vsel %vm1283, %v1301, %v1302
      %v1304 = vsel %vm1283, %v1302, %v1287
      %v1305 = vrot.slane %v561, 2
      %v1306 = vrot.slane %v566, 2
      %v1307 = vsel %vm1283, %v1305, %v1306
      %v1308 = vsel %vm1283, %v1306, %v1287
      %v1309 = vrot.slane %v571, 2
      %v1310 = vrot.slane %v576, 2
      %v1311 = vsel %vm1283, %v1309, %v1310
      %v1312 = vsel %vm1283, %v1310, %v1287
      %v1313 = vrot.slane %v581, 2
      %v1314 = vrot.slane %v586, 2
      %v1315 = vsel %vm1283, %v1313, %v1314
      %v1316 = vsel %vm1283, %v1314, %v1287
      %v1317 = vrot.slane %v591, 2
      %v1318 = vrot.slane %v596, 2
      %v1319 = vsel %vm1283, %v1317, %v1318
      %v1320 = vsel %vm1283, %v1318, %v1287
      %v1321 = vrot.slane %v601, 2
      %v1322 = vrot.slane %v606, 2
      %v1323 = vsel %vm1283, %v1321, %v1322
      %v1324 = vsel %vm1283, %v1322, %v1287
      %v1325 = vrot.slane %v611, 2
      %v1326 = vrot.slane %v616, 2
      %v1327 = vsel %vm1283, %v1325, %v1326
      %v1328 = vsel %vm1283, %v1326, %v1287
      %v1329 = vrot.slane %v621, 2
      %v1330 = vrot.slane %v626, 2
      %v1331 = vsel %vm1283, %v1329, %v1330
      %v1332 = vsel %vm1283, %v1330, %v1287
      %v1333 = vrot.slane %v631, 2
      %v1334 = vrot.slane %v636, 2
      %v1335 = vsel %vm1283, %v1333, %v1334
      %v1336 = vsel %vm1283, %v1334, %v1287
      %v1337 = vrot.slane %v641, 2
      %v1338 = vrot.slane %v646, 2
      %v1339 = vsel %vm1283, %v1337, %v1338
      %v1340 = vsel %vm1283, %v1338, %v1287
      %v1341 = vrot.slane %v651, 2
      %v1342 = vrot.slane %v656, 2
      %v1343 = vsel %vm1283, %v1341, %v1342
      %v1344 = vsel %vm1283, %v1342, %v1287
      %v1345 = vrot.slane %v661, 2
      %v1346 = vrot.slane %v666, 2
      %v1347 = vsel %vm1283, %v1345, %v1346
      %v1348 = vsel %vm1283, %v1346, %v1287
      %v1381 = vpack.c.bf16 %v1288, %v1286
      %v1382 = vpack.c.bf16 %v1292, %v1291
      %v1383 = vpack.c.bf16 %v1296, %v1295
      %v1384 = vpack.c.bf16 %v1300, %v1299
      %v1385 = vpack.c.bf16 %v1304, %v1303
      %v1386 = vpack.c.bf16 %v1308, %v1307
      %v1387 = vpack.c.bf16 %v1312, %v1311
      %v1388 = vpack.c.bf16 %v1316, %v1315
      %v1389 = vpack.c.bf16 %v1320, %v1319
      %v1390 = vpack.c.bf16 %v1324, %v1323
      %v1391 = vpack.c.bf16 %v1328, %v1327
      %v1392 = vpack.c.bf16 %v1332, %v1331
      %v1393 = vpack.c.bf16 %v1336, %v1335
      %v1394 = vpack.c.bf16 %v1340, %v1339
      %v1395 = vpack.c.bf16 %v1344, %v1343
      %v1396 = vpack.c.bf16 %v1348, %v1347
      %v1397 = vld [vmem:[%s2 + $0x20] sm:$0xf]
      %v1398 = vld [vmem:[%s2 + $0x24] sm:$0xf]
      %v1399 = vld [vmem:[%s2 + $0x28] sm:$0xf]
      %v1400 = vld [vmem:[%s2 + $0x2c] sm:$0xf]
      %v1405 = vunpack.c.l.b16 %v1397
      %v1406 = vunpack.c.l.b16 %v1398
      %v1407 = vunpack.c.l.b16 %v1399
      %v1408 = vunpack.c.l.b16 %v1400
      %v1409 = vpack.c.b16 %v1406, %v1405
      %v1410 = vpack.c.b16 %v1408, %v1407
      %v1414 = vsel %vm852, %v1381, 0
      %v1417 = vsel %vm852, %v1382, 0
      %v1420 = vsel %vm852, %v1383, 0
      %v1423 = vsel %vm852, %v1384, 0
      %v1426 = vsel %vm852, %v1385, 0
      %v1429 = vsel %vm852, %v1386, 0
      %v1432 = vsel %vm852, %v1387, 0
      %v1435 = vsel %vm852, %v1388, 0
      %v1438 = vsel %vm852, %v1389, 0
      %v1441 = vsel %vm852, %v1390, 0
      %v1444 = vsel %vm852, %v1391, 0
      %v1447 = vsel %vm852, %v1392, 0
      %v1450 = vsel %vm852, %v1393, 0
      %v1453 = vsel %vm852, %v1394, 0
      %v1456 = vsel %vm852, %v1395, 0
      %v1459 = vsel %vm852, %v1396, 0
      %1461 = vmatprep.subr.bf16.mxu0 0
      %1462 = vmatpush1.bf16.msra.mxu0 %v1409
      %1463 = vmatprep.subr.bf16.mxu0 0
      %1464 = vmatpush1.bf16.msra.mxu0 %v1410
      %1465 = vmatprep.subr.bf16.mxu0 0
      %1466 = vmatpush1.bf16.msra.mxu0 0
      %1467 = vmatprep.subr.bf16.mxu0 0
      %1468 = vmatpush1.bf16.msra.mxu0 0
      %1469 = vmatprep.subr.bf16.mxu0 0
      %1470 = vmatpush1.bf16.msra.mxu0 0
      %1471 = vmatprep.subr.bf16.mxu0 0
      %1472 = vmatpush1.bf16.msra.mxu0 0
      %1473 = vmatprep.subr.bf16.mxu0 0
      %1474 = vmatpush1.bf16.msra.mxu0 0
      %1475 = vmatprep.subr.bf16.mxu0 0
      %1476 = vmatpush1.bf16.msra.mxu0 0
      %1477 = vmatprep.subr.bf16.mxu0 0
      %1478 = vmatpush1.bf16.msra.mxu0 0
      %1479 = vmatprep.subr.bf16.mxu0 0
      %1480 = vmatpush1.bf16.msra.mxu0 0
      %1481 = vmatprep.subr.bf16.mxu0 0
      %1482 = vmatpush1.bf16.msra.mxu0 0
      %1483 = vmatprep.subr.bf16.mxu0 0
      %1484 = vmatpush1.bf16.msra.mxu0 0
      %1485 = vmatprep.subr.bf16.mxu0 0
      %1486 = vmatpush1.bf16.msra.mxu0 0
      %1487 = vmatprep.subr.bf16.mxu0 0
      %1488 = vmatpush1.bf16.msra.mxu0 0
      %1489 = vmatprep.subr.bf16.mxu0 0
      %1490 = vmatpush1.bf16.msra.mxu0 0
      %1491 = vmatprep.subr.bf16.mxu0 0
      %1492 = vmatpush1.bf16.msra.mxu0 0
      %1493 = vmatprep.mubr.bf16.mxu0 0
      %1494 = vmatmul.mubr.bf16.gmra.mrb[0].mxu0 %v1414
      %v1495 = vpop.f32.mrb[0].mxu0
      %v1496 = vadd.f32 0.0, %v1495
      %v1497 = vpop.f32.mrb[0].mxu0
      %v1498 = vpop.f32.mrb[0].mxu0
      %v1499 = vadd.f32 0.0, %v1498
      %v1500 = vpop.f32.mrb[0].mxu0
      %1501 = vmatprep.mubr.bf16.mxu0 0
      %1502 = vmatmul.mubr.bf16.gmra.mrb[0].mxu0 %v1417
      %v1503 = vpop.f32.mrb[0].mxu0
      %v1504 = vadd.f32 0.0, %v1503
      %v1505 = vpop.f32.mrb[0].mxu0
      %v1506 = vpop.f32.mrb[0].mxu0
      %v1507 = vadd.f32 0.0, %v1506
      %v1508 = vpop.f32.mrb[0].mxu0
      %1509 = vmatprep.mubr.bf16.mxu0 0
      %1510 = vmatmul.mubr.bf16.gmra.mrb[0].mxu0 %v1420
      %v1511 = vpop.f32.mrb[0].mxu0
      %v1512 = vadd.f32 0.0, %v1511
      %v1513 = vpop.f32.mrb[0].mxu0
      %v1514 = vpop.f32.mrb[0].mxu0
      %v1515 = vadd.f32 0.0, %v1514
      %v1516 = vpop.f32.mrb[0].mxu0
      %1517 = vmatprep.mubr.bf16.mxu0 0
      %1518 = vmatmul.mubr.bf16.gmra.mrb[0].mxu0 %v1423
      %v1519 = vpop.f32.mrb[0].mxu0
      %v1520 = vadd.f32 0.0, %v1519
      %v1521 = vpop.f32.mrb[0].mxu0
      %v1522 = vpop.f32.mrb[0].mxu0
      %v1523 = vadd.f32 0.0, %v1522
      %v1524 = vpop.f32.mrb[0].mxu0
      %1525 = vmatprep.mubr.bf16.mxu0 0
      %1526 = vmatmul.mubr.bf16.gmra.mrb[0].mxu0 %v1426
      %v1527 = vpop.f32.mrb[0].mxu0
      %v1528 = vadd.f32 0.0, %v1527
      %v1529 = vpop.f32.mrb[0].mxu0
      %v1530 = vpop.f32.mrb[0].mxu0
      %v1531 = vadd.f32 0.0, %v1530
      %v1532 = vpop.f32.mrb[0].mxu0
      %1533 = vmatprep.mubr.bf16.mxu0 0
      %1534 = vmatmul.mubr.bf16.gmra.mrb[0].mxu0 %v1429
      %v1535 = vpop.f32.mrb[0].mxu0
      %v1536 = vadd.f32 0.0, %v1535
      %v1537 = vpop.f32.mrb[0].mxu0
      %v1538 = vpop.f32.mrb[0].mxu0
      %v1539 = vadd.f32 0.0, %v1538
      %v1540 = vpop.f32.mrb[0].mxu0
      %1541 = vmatprep.mubr.bf16.mxu0 0
      %1542 = vmatmul.mubr.bf16.gmra.mrb[0].mxu0 %v1432
      %v1543 = vpop.f32.mrb[0].mxu0
      %v1544 = vadd.f32 0.0, %v1543
      %v1545 = vpop.f32.mrb[0].mxu0
      %v1546 = vpop.f32.mrb[0].mxu0
      %v1547 = vadd.f32 0.0, %v1546
      %v1548 = vpop.f32.mrb[0].mxu0
      %1549 = vmatprep.mubr.bf16.mxu0 0
      %1550 = vmatmul.mubr.bf16.gmra.mrb[0].mxu0 %v1435
      %v1551 = vpop.f32.mrb[0].mxu0
      %v1552 = vadd.f32 0.0, %v1551
      %v1553 = vpop.f32.mrb[0].mxu0
      %v1554 = vpop.f32.mrb[0].mxu0
      %v1555 = vadd.f32 0.0, %v1554
      %v1556 = vpop.f32.mrb[0].mxu0
      %1557 = vmatprep.mubr.bf16.mxu0 0
      %1558 = vmatmul.mubr.bf16.gmra.mrb[0].mxu0 %v1438
      %v1559 = vpop.f32.mrb[0].mxu0
      %v1560 = vadd.f32 0.0, %v1559
      %v1561 = vpop.f32.mrb[0].mxu0
      %v1562 = vpop.f32.mrb[0].mxu0
      %v1563 = vadd.f32 0.0, %v1562
      %v1564 = vpop.f32.mrb[0].mxu0
      %1565 = vmatprep.mubr.bf16.mxu0 0
      %1566 = vmatmul.mubr.bf16.gmra.mrb[0].mxu0 %v1441
      %v1567 = vpop.f32.mrb[0].mxu0
      %v1568 = vadd.f32 0.0, %v1567
      %v1569 = vpop.f32.mrb[0].mxu0
      %v1570 = vpop.f32.mrb[0].mxu0
      %v1571 = vadd.f32 0.0, %v1570
      %v1572 = vpop.f32.mrb[0].mxu0
      %1573 = vmatprep.mubr.bf16.mxu0 0
      %1574 = vmatmul.mubr.bf16.gmra.mrb[0].mxu0 %v1444
      %v1575 = vpop.f32.mrb[0].mxu0
      %v1576 = vadd.f32 0.0, %v1575
      %v1577 = vpop.f32.mrb[0].mxu0
      %v1578 = vpop.f32.mrb[0].mxu0
      %v1579 = vadd.f32 0.0, %v1578
      %v1580 = vpop.f32.mrb[0].mxu0
      %1581 = vmatprep.mubr.bf16.mxu0 0
      %1582 = vmatmul.mubr.bf16.gmra.mrb[0].mxu0 %v1447
      %v1583 = vpop.f32.mrb[0].mxu0
      %v1584 = vadd.f32 0.0, %v1583
      %v1585 = vpop.f32.mrb[0].mxu0
      %v1586 = vpop.f32.mrb[0].mxu0
      %v1587 = vadd.f32 0.0, %v1586
      %v1588 = vpop.f32.mrb[0].mxu0
      %1589 = vmatprep.mubr.bf16.mxu0 0
      %1590 = vmatmul.mubr.bf16.gmra.mrb[0].mxu0 %v1450
      %v1591 = vpop.f32.mrb[0].mxu0
      %v1592 = vadd.f32 0.0, %v1591
      %v1593 = vpop.f32.mrb[0].mxu0
      %v1594 = vpop.f32.mrb[0].mxu0
      %v1595 = vadd.f32 0.0, %v1594
      %v1596 = vpop.f32.mrb[0].mxu0
      %1597 = vmatprep.mubr.bf16.mxu0 0
      %1598 = vmatmul.mubr.bf16.gmra.mrb[0].mxu0 %v1453
      %v1599 = vpop.f32.mrb[0].mxu0
      %v1600 = vadd.f32 0.0, %v1599
      %v1601 = vpop.f32.mrb[0].mxu0
      %v1602 = vpop.f32.mrb[0].mxu0
      %v1603 = vadd.f32 0.0, %v1602
      %v1604 = vpop.f32.mrb[0].mxu0
      %1605 = vmatprep.mubr.bf16.mxu0 0
      %1606 = vmatmul.mubr.bf16.gmra.mrb[0].mxu0 %v1456
      %v1607 = vpop.f32.mrb[0].mxu0
      %v1608 = vadd.f32 0.0, %v1607
      %v1609 = vpop.f32.mrb[0].mxu0
      %v1610 = vpop.f32.mrb[0].mxu0
      %v1611 = vadd.f32 0.0, %v1610
      %v1612 = vpop.f32.mrb[0].mxu0
      %1613 = vmatprep.mubr.bf16.mxu0 0
      %1614 = vmatmul.mubr.bf16.gmra.mrb[0].mxu0 %v1459
      %v1615 = vpop.f32.mrb[0].mxu0
      %v1616 = vadd.f32 0.0, %v1615
      %v1617 = vpop.f32.mrb[0].mxu0
      %v1618 = vpop.f32.mrb[0].mxu0
      %v1619 = vadd.f32 0.0, %v1618
      %v1620 = vpop.f32.mrb[0].mxu0
      %1621 = vdwg.mxu0
      %v1622 = vadd.f32 %v1157, %v1496
      %v1623 = vadd.f32 %v1160, %v1499
      %v1624 = vadd.f32 %v1165, %v1504
      %v1625 = vadd.f32 %v1168, %v1507
      %v1626 = vadd.f32 %v1173, %v1512
      %v1627 = vadd.f32 %v1176, %v1515
      %v1628 = vadd.f32 %v1181, %v1520
      %v1629 = vadd.f32 %v1184, %v1523
      %v1630 = vadd.f32 %v1189, %v1528
      %v1631 = vadd.f32 %v1192, %v1531
      %v1632 = vadd.f32 %v1197, %v1536
      %v1633 = vadd.f32 %v1200, %v1539
      %v1634 = vadd.f32 %v1205, %v1544
      %v1635 = vadd.f32 %v1208, %v1547
      %v1636 = vadd.f32 %v1213, %v1552
      %v1637 = vadd.f32 %v1216, %v1555
      %v1638 = vadd.f32 %v1221, %v1560
      %v1639 = vadd.f32 %v1224, %v1563
      %v1640 = vadd.f32 %v1229, %v1568
      %v1641 = vadd.f32 %v1232, %v1571
      %v1642 = vadd.f32 %v1237, %v1576
      %v1643 = vadd.f32 %v1240, %v1579
      %v1644 = vadd.f32 %v1245, %v1584
      %v1645 = vadd.f32 %v1248, %v1587
      %v1646 = vadd.f32 %v1253, %v1592
      %v1647 = vadd.f32 %v1256, %v1595
      %v1648 = vadd.f32 %v1261, %v1600
      %v1649 = vadd.f32 %v1264, %v1603
      %v1650 = vadd.f32 %v1269, %v1608
      %v1651 = vadd.f32 %v1272, %v1611
      %v1652 = vadd.f32 %v1277, %v1616
      %v1653 = vadd.f32 %v1280, %v1619
      %vm1654 = vcmask 1044480
      %v1655 = vrot.slane %v511, 3
      %v1656 = vrot.slane %v516, 3
      %v1657 = vsel %vm1654, %v1655, %v1656
      %v1658 = vrot.slane 0.0, 3
      %v1659 = vsel %vm1654, %v1656, %v1658
      %v1660 = vrot.slane %v521, 3
      %v1661 = vrot.slane %v526, 3
      %v1662 = vsel %vm1654, %v1660, %v1661
      %v1663 = vsel %vm1654, %v1661, %v1658
      %v1664 = vrot.slane %v531, 3
      %v1665 = vrot.slane %v536, 3
      %v1666 = vsel %vm1654, %v1664, %v1665
      %v1667 = vsel %vm1654, %v1665, %v1658
      %v1668 = vrot.slane %v541, 3
      %v1669 = vrot.slane %v546, 3
      %v1670 = vsel %vm1654, %v1668, %v1669
      %v1671 = vsel %vm1654, %v1669, %v1658
      %v1672 = vrot.slane %v551, 3
      %v1673 = vrot.slane %v556, 3
      %v1674 = vsel %vm1654, %v1672, %v1673
      %v1675 = vsel %vm1654, %v1673, %v1658
      %v1676 = vrot.slane %v561, 3
      %v1677 = vrot.slane %v566, 3
      %v1678 = vsel %vm1654, %v1676, %v1677
      %v1679 = vsel %vm1654, %v1677, %v1658
      %v1680 = vrot.slane %v571, 3
      %v1681 = vrot.slane %v576, 3
      %v1682 = vsel %vm1654, %v1680, %v1681
      %v1683 = vsel %vm1654, %v1681, %v1658
      %v1684 = vrot.slane %v581, 3
      %v1685 = vrot.slane %v586, 3
      %v1686 = vsel %vm1654, %v1684, %v1685
      %v1687 = vsel %vm1654, %v1685, %v1658
      %v1688 = vrot.slane %v591, 3
      %v1689 = vrot.slane %v596, 3
      %v1690 = vsel %vm1654, %v1688, %v1689
      %v1691 = vsel %vm1654, %v1689, %v1658
      %v1692 = vrot.slane %v601, 3
      %v1693 = vrot.slane %v606, 3
      %v1694 = vsel %vm1654, %v1692, %v1693
      %v1695 = vsel %vm1654, %v1693, %v1658
      %v1696 = vrot.slane %v611, 3
      %v1697 = vrot.slane %v616, 3
      %v1698 = vsel %vm1654, %v1696, %v1697
      %v1699 = vsel %vm1654, %v1697, %v1658
      %v1700 = vrot.slane %v621, 3
      %v1701 = vrot.slane %v626, 3
      %v1702 = vsel %vm1654, %v1700, %v1701
      %v1703 = vsel %vm1654, %v1701, %v1658
      %v1704 = vrot.slane %v631, 3
      %v1705 = vrot.slane %v636, 3
      %v1706 = vsel %vm1654, %v1704, %v1705
      %v1707 = vsel %vm1654, %v1705, %v1658
      %v1708 = vrot.slane %v641, 3
      %v1709 = vrot.slane %v646, 3
      %v1710 = vsel %vm1654, %v1708, %v1709
      %v1711 = vsel %vm1654, %v1709, %v1658
      %v1712 = vrot.slane %v651, 3
      %v1713 = vrot.slane %v656, 3
      %v1714 = vsel %vm1654, %v1712, %v1713
      %v1715 = vsel %vm1654, %v1713, %v1658
      %v1716 = vrot.slane %v661, 3
      %v1717 = vrot.slane %v666, 3
      %v1718 = vsel %vm1654, %v1716, %v1717
      %v1719 = vsel %vm1654, %v1717, %v1658
      %v1752 = vpack.c.bf16 %v1659, %v1657
      %v1753 = vpack.c.bf16 %v1663, %v1662
      %v1754 = vpack.c.bf16 %v1667, %v1666
      %v1755 = vpack.c.bf16 %v1671, %v1670
      %v1756 = vpack.c.bf16 %v1675, %v1674
      %v1757 = vpack.c.bf16 %v1679, %v1678
      %v1758 = vpack.c.bf16 %v1683, %v1682
      %v1759 = vpack.c.bf16 %v1687, %v1686
      %v1760 = vpack.c.bf16 %v1691, %v1690
      %v1761 = vpack.c.bf16 %v1695, %v1694
      %v1762 = vpack.c.bf16 %v1699, %v1698
      %v1763 = vpack.c.bf16 %v1703, %v1702
      %v1764 = vpack.c.bf16 %v1707, %v1706
      %v1765 = vpack.c.bf16 %v1711, %v1710
      %v1766 = vpack.c.bf16 %v1715, %v1714
      %v1767 = vpack.c.bf16 %v1719, %v1718
      %v1768 = vld [vmem:[%s2 + $0x30] sm:$0xf]
      %v1769 = vld [vmem:[%s2 + $0x34] sm:$0xf]
      %v1770 = vld [vmem:[%s2 + $0x38] sm:$0xf]
      %v1771 = vld [vmem:[%s2 + $0x3c] sm:$0xf]
      %v1776 = vunpack.c.l.b16 %v1768
      %v1777 = vunpack.c.l.b16 %v1769
      %v1778 = vunpack.c.l.b16 %v1770
      %v1779 = vunpack.c.l.b16 %v1771
      %v1780 = vpack.c.b16 %v1777, %v1776
      %v1781 = vpack.c.b16 %v1779, %v1778
      %v1785 = vsel %vm852, %v1752, 0
      %v1788 = vsel %vm852, %v1753, 0
      %v1791 = vsel %vm852, %v1754, 0
      %v1794 = vsel %vm852, %v1755, 0
      %v1797 = vsel %vm852, %v1756, 0
      %v1800 = vsel %vm852, %v1757, 0
      %v1803 = vsel %vm852, %v1758, 0
      %v1806 = vsel %vm852, %v1759, 0
      %v1809 = vsel %vm852, %v1760, 0
      %v1812 = vsel %vm852, %v1761, 0
      %v1815 = vsel %vm852, %v1762, 0
      %v1818 = vsel %vm852, %v1763, 0
      %v1821 = vsel %vm852, %v1764, 0
      %v1824 = vsel %vm852, %v1765, 0
      %v1827 = vsel %vm852, %v1766, 0
      %v1830 = vsel %vm852, %v1767, 0
      %1832 = vmatprep.subr.bf16.mxu0 0
      %1833 = vmatpush1.bf16.msra.mxu0 %v1780
      %1834 = vmatprep.subr.bf16.mxu0 0
      %1835 = vmatpush1.bf16.msra.mxu0 %v1781
      %1836 = vmatprep.subr.bf16.mxu0 0
      %1837 = vmatpush1.bf16.msra.mxu0 0
      %1838 = vmatprep.subr.bf16.mxu0 0
      %1839 = vmatpush1.bf16.msra.mxu0 0
      %1840 = vmatprep.subr.bf16.mxu0 0
      %1841 = vmatpush1.bf16.msra.mxu0 0
      %1842 = vmatprep.subr.bf16.mxu0 0
      %1843 = vmatpush1.bf16.msra.mxu0 0
      %1844 = vmatprep.subr.bf16.mxu0 0
      %1845 = vmatpush1.bf16.msra.mxu0 0
      %1846 = vmatprep.subr.bf16.mxu0 0
      %1847 = vmatpush1.bf16.msra.mxu0 0
      %1848 = vmatprep.subr.bf16.mxu0 0
      %1849 = vmatpush1.bf16.msra.mxu0 0
      %1850 = vmatprep.subr.bf16.mxu0 0
      %1851 = vmatpush1.bf16.msra.mxu0 0
      %1852 = vmatprep.subr.bf16.mxu0 0
      %1853 = vmatpush1.bf16.msra.mxu0 0
      %1854 = vmatprep.subr.bf16.mxu0 0
      %1855 = vmatpush1.bf16.msra.mxu0 0
      %1856 = vmatprep.subr.bf16.mxu0 0
      %1857 = vmatpush1.bf16.msra.mxu0 0
      %1858 = vmatprep.subr.bf16.mxu0 0
      %1859 = vmatpush1.bf16.msra.mxu0 0
      %1860 = vmatprep.subr.bf16.mxu0 0
      %1861 = vmatpush1.bf16.msra.mxu0 0
      %1862 = vmatprep.subr.bf16.mxu0 0
      %1863 = vmatpush1.bf16.msra.mxu0 0
      %1864 = vmatprep.mubr.bf16.mxu0 0
      %1865 = vmatmul.mubr.bf16.gmra.mrb[0].mxu0 %v1785
      %v1866 = vpop.f32.mrb[0].mxu0
      %v1867 = vadd.f32 0.0, %v1866
      %v1868 = vpop.f32.mrb[0].mxu0
      %v1869 = vpop.f32.mrb[0].mxu0
      %v1870 = vadd.f32 0.0, %v1869
      %v1871 = vpop.f32.mrb[0].mxu0
      %1872 = vmatprep.mubr.bf16.mxu0 0
      %1873 = vmatmul.mubr.bf16.gmra.mrb[0].mxu0 %v1788
      %v1874 = vpop.f32.mrb[0].mxu0
      %v1875 = vadd.f32 0.0, %v1874
      %v1876 = vpop.f32.mrb[0].mxu0
      %v1877 = vpop.f32.mrb[0].mxu0
      %v1878 = vadd.f32 0.0, %v1877
      %v1879 = vpop.f32.mrb[0].mxu0
      %1880 = vmatprep.mubr.bf16.mxu0 0
      %1881 = vmatmul.mubr.bf16.gmra.mrb[0].mxu0 %v1791
      %v1882 = vpop.f32.mrb[0].mxu0
      %v1883 = vadd.f32 0.0, %v1882
      %v1884 = vpop.f32.mrb[0].mxu0
      %v1885 = vpop.f32.mrb[0].mxu0
      %v1886 = vadd.f32 0.0, %v1885
      %v1887 = vpop.f32.mrb[0].mxu0
      %1888 = vmatprep.mubr.bf16.mxu0 0
      %1889 = vmatmul.mubr.bf16.gmra.mrb[0].mxu0 %v1794
      %v1890 = vpop.f32.mrb[0].mxu0
      %v1891 = vadd.f32 0.0, %v1890
      %v1892 = vpop.f32.mrb[0].mxu0
      %v1893 = vpop.f32.mrb[0].mxu0
      %v1894 = vadd.f32 0.0, %v1893
      %v1895 = vpop.f32.mrb[0].mxu0
      %1896 = vmatprep.mubr.bf16.mxu0 0
      %1897 = vmatmul.mubr.bf16.gmra.mrb[0].mxu0 %v1797
      %v1898 = vpop.f32.mrb[0].mxu0
      %v1899 = vadd.f32 0.0, %v1898
      %v1900 = vpop.f32.mrb[0].mxu0
      %v1901 = vpop.f32.mrb[0].mxu0
      %v1902 = vadd.f32 0.0, %v1901
      %v1903 = vpop.f32.mrb[0].mxu0
      %1904 = vmatprep.mubr.bf16.mxu0 0
      %1905 = vmatmul.mubr.bf16.gmra.mrb[0].mxu0 %v1800
      %v1906 = vpop.f32.mrb[0].mxu0
      %v1907 = vadd.f32 0.0, %v1906
      %v1908 = vpop.f32.mrb[0].mxu0
      %v1909 = vpop.f32.mrb[0].mxu0
      %v1910 = vadd.f32 0.0, %v1909
      %v1911 = vpop.f32.mrb[0].mxu0
      %1912 = vmatprep.mubr.bf16.mxu0 0
      %1913 = vmatmul.mubr.bf16.gmra.mrb[0].mxu0 %v1803
      %v1914 = vpop.f32.mrb[0].mxu0
      %v1915 = vadd.f32 0.0, %v1914
      %v1916 = vpop.f32.mrb[0].mxu0
      %v1917 = vpop.f32.mrb[0].mxu0
      %v1918 = vadd.f32 0.0, %v1917
      %v1919 = vpop.f32.mrb[0].mxu0
      %1920 = vmatprep.mubr.bf16.mxu0 0
      %1921 = vmatmul.mubr.bf16.gmra.mrb[0].mxu0 %v1806
      %v1922 = vpop.f32.mrb[0].mxu0
      %v1923 = vadd.f32 0.0, %v1922
      %v1924 = vpop.f32.mrb[0].mxu0
      %v1925 = vpop.f32.mrb[0].mxu0
      %v1926 = vadd.f32 0.0, %v1925
      %v1927 = vpop.f32.mrb[0].mxu0
      %1928 = vmatprep.mubr.bf16.mxu0 0
      %1929 = vmatmul.mubr.bf16.gmra.mrb[0].mxu0 %v1809
      %v1930 = vpop.f32.mrb[0].mxu0
      %v1931 = vadd.f32 0.0, %v1930
      %v1932 = vpop.f32.mrb[0].mxu0
      %v1933 = vpop.f32.mrb[0].mxu0
      %v1934 = vadd.f32 0.0, %v1933
      %v1935 = vpop.f32.mrb[0].mxu0
      %1936 = vmatprep.mubr.bf16.mxu0 0
      %1937 = vmatmul.mubr.bf16.gmra.mrb[0].mxu0 %v1812
      %v1938 = vpop.f32.mrb[0].mxu0
      %v1939 = vadd.f32 0.0, %v1938
      %v1940 = vpop.f32.mrb[0].mxu0
      %v1941 = vpop.f32.mrb[0].mxu0
      %v1942 = vadd.f32 0.0, %v1941
      %v1943 = vpop.f32.mrb[0].mxu0
      %1944 = vmatprep.mubr.bf16.mxu0 0
      %1945 = vmatmul.mubr.bf16.gmra.mrb[0].mxu0 %v1815
      %v1946 = vpop.f32.mrb[0].mxu0
      %v1947 = vadd.f32 0.0, %v1946
      %v1948 = vpop.f32.mrb[0].mxu0
      %v1949 = vpop.f32.mrb[0].mxu0
      %v1950 = vadd.f32 0.0, %v1949
      %v1951 = vpop.f32.mrb[0].mxu0
      %1952 = vmatprep.mubr.bf16.mxu0 0
      %1953 = vmatmul.mubr.bf16.gmra.mrb[0].mxu0 %v1818
      %v1954 = vpop.f32.mrb[0].mxu0
      %v1955 = vadd.f32 0.0, %v1954
      %v1956 = vpop.f32.mrb[0].mxu0
      %v1957 = vpop.f32.mrb[0].mxu0
      %v1958 = vadd.f32 0.0, %v1957
      %v1959 = vpop.f32.mrb[0].mxu0
      %1960 = vmatprep.mubr.bf16.mxu0 0
      %1961 = vmatmul.mubr.bf16.gmra.mrb[0].mxu0 %v1821
      %v1962 = vpop.f32.mrb[0].mxu0
      %v1963 = vadd.f32 0.0, %v1962
      %v1964 = vpop.f32.mrb[0].mxu0
      %v1965 = vpop.f32.mrb[0].mxu0
      %v1966 = vadd.f32 0.0, %v1965
      %v1967 = vpop.f32.mrb[0].mxu0
      %1968 = vmatprep.mubr.bf16.mxu0 0
      %1969 = vmatmul.mubr.bf16.gmra.mrb[0].mxu0 %v1824
      %v1970 = vpop.f32.mrb[0].mxu0
      %v1971 = vadd.f32 0.0, %v1970
      %v1972 = vpop.f32.mrb[0].mxu0
      %v1973 = vpop.f32.mrb[0].mxu0
      %v1974 = vadd.f32 0.0, %v1973
      %v1975 = vpop.f32.mrb[0].mxu0
      %1976 = vmatprep.mubr.bf16.mxu0 0
      %1977 = vmatmul.mubr.bf16.gmra.mrb[0].mxu0 %v1827
      %v1978 = vpop.f32.mrb[0].mxu0
      %v1979 = vadd.f32 0.0, %v1978
      %v1980 = vpop.f32.mrb[0].mxu0
      %v1981 = vpop.f32.mrb[0].mxu0
      %v1982 = vadd.f32 0.0, %v1981
      %v1983 = vpop.f32.mrb[0].mxu0
      %1984 = vmatprep.mubr.bf16.mxu0 0
      %1985 = vmatmul.mubr.bf16.gmra.mrb[0].mxu0 %v1830
      %v1986 = vpop.f32.mrb[0].mxu0
      %v1987 = vadd.f32 0.0, %v1986
      %v1988 = vpop.f32.mrb[0].mxu0
      %v1989 = vpop.f32.mrb[0].mxu0
      %v1990 = vadd.f32 0.0, %v1989
      %v1991 = vpop.f32.mrb[0].mxu0
      %1992 = vdwg.mxu0
      %v1993 = vadd.f32 %v1622, %v1867
      %v1994 = vadd.f32 %v1623, %v1870
      %v1995 = vadd.f32 %v1624, %v1875
      %v1996 = vadd.f32 %v1625, %v1878
      %v1997 = vadd.f32 %v1626, %v1883
      %v1998 = vadd.f32 %v1627, %v1886
      %v1999 = vadd.f32 %v1628, %v1891
      %v2000 = vadd.f32 %v1629, %v1894
      %v2001 = vadd.f32 %v1630, %v1899
      %v2002 = vadd.f32 %v1631, %v1902
      %v2003 = vadd.f32 %v1632, %v1907
      %v2004 = vadd.f32 %v1633, %v1910
      %v2005 = vadd.f32 %v1634, %v1915
      %v2006 = vadd.f32 %v1635, %v1918
      %v2007 = vadd.f32 %v1636, %v1923
      %v2008 = vadd.f32 %v1637, %v1926
      %v2009 = vadd.f32 %v1638, %v1931
      %v2010 = vadd.f32 %v1639, %v1934
      %v2011 = vadd.f32 %v1640, %v1939
      %v2012 = vadd.f32 %v1641, %v1942
      %v2013 = vadd.f32 %v1642, %v1947
      %v2014 = vadd.f32 %v1643, %v1950
      %v2015 = vadd.f32 %v1644, %v1955
      %v2016 = vadd.f32 %v1645, %v1958
      %v2017 = vadd.f32 %v1646, %v1963
      %v2018 = vadd.f32 %v1647, %v1966
      %v2019 = vadd.f32 %v1648, %v1971
      %v2020 = vadd.f32 %v1649, %v1974
      %v2021 = vadd.f32 %v1650, %v1979
      %v2022 = vadd.f32 %v1651, %v1982
      %v2023 = vadd.f32 %v1652, %v1987
      %v2024 = vadd.f32 %v1653, %v1990
      %v2025 = vld [vmem:[%s3] sm:$0x1]
      %v2026 = vlaneseq
      %v2027 = vshrl.u32 %v2026, 7
      %v2028 = vsub.s32 0, %v2027
      %v2029 = vrot.slane %v2025, %v2028
      %v2030 = vadd.f32 %v1993, %v2029
      %v2031 = vadd.f32 %v1994, %v2029
      %v2032 = vadd.f32 %v1995, %v2029
      %v2033 = vadd.f32 %v1996, %v2029
      %v2034 = vadd.f32 %v1997, %v2029
      %v2035 = vadd.f32 %v1998, %v2029
      %v2036 = vadd.f32 %v1999, %v2029
      %v2037 = vadd.f32 %v2000, %v2029
      %v2038 = vadd.f32 %v2001, %v2029
      %v2039 = vadd.f32 %v2002, %v2029
      %v2040 = vadd.f32 %v2003, %v2029
      %v2041 = vadd.f32 %v2004, %v2029
      %v2042 = vadd.f32 %v2005, %v2029
      %v2043 = vadd.f32 %v2006, %v2029
      %v2044 = vadd.f32 %v2007, %v2029
      %v2045 = vadd.f32 %v2008, %v2029
      %v2046 = vadd.f32 %v2009, %v2029
      %v2047 = vadd.f32 %v2010, %v2029
      %v2048 = vadd.f32 %v2011, %v2029
      %v2049 = vadd.f32 %v2012, %v2029
      %v2050 = vadd.f32 %v2013, %v2029
      %v2051 = vadd.f32 %v2014, %v2029
      %v2052 = vadd.f32 %v2015, %v2029
      %v2053 = vadd.f32 %v2016, %v2029
      %v2054 = vadd.f32 %v2017, %v2029
      %v2055 = vadd.f32 %v2018, %v2029
      %v2056 = vadd.f32 %v2019, %v2029
      %v2057 = vadd.f32 %v2020, %v2029
      %v2058 = vadd.f32 %v2021, %v2029
      %v2059 = vadd.f32 %v2022, %v2029
      %v2060 = vadd.f32 %v2023, %v2029
      %v2061 = vadd.f32 %v2024, %v2029
      %v2062 = vmax.f32 %v2030, 0.0
      %v2063 = vmax.f32 %v2031, 0.0
      %v2064 = vmax.f32 %v2032, 0.0
      %v2065 = vmax.f32 %v2033, 0.0
      %v2066 = vmax.f32 %v2034, 0.0
      %v2067 = vmax.f32 %v2035, 0.0
      %v2068 = vmax.f32 %v2036, 0.0
      %v2069 = vmax.f32 %v2037, 0.0
      %v2070 = vmax.f32 %v2038, 0.0
      %v2071 = vmax.f32 %v2039, 0.0
      %v2072 = vmax.f32 %v2040, 0.0
      %v2073 = vmax.f32 %v2041, 0.0
      %v2074 = vmax.f32 %v2042, 0.0
      %v2075 = vmax.f32 %v2043, 0.0
      %v2076 = vmax.f32 %v2044, 0.0
      %v2077 = vmax.f32 %v2045, 0.0
      %v2078 = vmax.f32 %v2046, 0.0
      %v2079 = vmax.f32 %v2047, 0.0
      %v2080 = vmax.f32 %v2048, 0.0
      %v2081 = vmax.f32 %v2049, 0.0
      %v2082 = vmax.f32 %v2050, 0.0
      %v2083 = vmax.f32 %v2051, 0.0
      %v2084 = vmax.f32 %v2052, 0.0
      %v2085 = vmax.f32 %v2053, 0.0
      %v2086 = vmax.f32 %v2054, 0.0
      %v2087 = vmax.f32 %v2055, 0.0
      %v2088 = vmax.f32 %v2056, 0.0
      %v2089 = vmax.f32 %v2057, 0.0
      %v2090 = vmax.f32 %v2058, 0.0
      %v2091 = vmax.f32 %v2059, 0.0
      %v2092 = vmax.f32 %v2060, 0.0
      %v2093 = vmax.f32 %v2061, 0.0
      %v2094 = vld [vmem:[%s3 + $0x8] sm:$0xff]
      %v2095 = vld [vmem:[%s3 + $0x10] sm:$0xff]
      %v2096 = vadd.f32 %v2062, %v2094
      %v2097 = vadd.f32 %v2063, %v2095
      %v2098 = vadd.f32 %v2064, %v2094
      %v2099 = vadd.f32 %v2065, %v2095
      %v2100 = vadd.f32 %v2066, %v2094
      %v2101 = vadd.f32 %v2067, %v2095
      %v2102 = vadd.f32 %v2068, %v2094
      %v2103 = vadd.f32 %v2069, %v2095
      %v2104 = vadd.f32 %v2070, %v2094
      %v2105 = vadd.f32 %v2071, %v2095
      %v2106 = vadd.f32 %v2072, %v2094
      %v2107 = vadd.f32 %v2073, %v2095
      %v2108 = vadd.f32 %v2074, %v2094
      %v2109 = vadd.f32 %v2075, %v2095
      %v2110 = vadd.f32 %v2076, %v2094
      %v2111 = vadd.f32 %v2077, %v2095
      %v2112 = vadd.f32 %v2078, %v2094
      %v2113 = vadd.f32 %v2079, %v2095
      %v2114 = vadd.f32 %v2080, %v2094
      %v2115 = vadd.f32 %v2081, %v2095
      %v2116 = vadd.f32 %v2082, %v2094
      %v2117 = vadd.f32 %v2083, %v2095
      %v2118 = vadd.f32 %v2084, %v2094
      %v2119 = vadd.f32 %v2085, %v2095
      %v2120 = vadd.f32 %v2086, %v2094
      %v2121 = vadd.f32 %v2087, %v2095
      %v2122 = vadd.f32 %v2088, %v2094
      %v2123 = vadd.f32 %v2089, %v2095
      %v2124 = vadd.f32 %v2090, %v2094
      %v2125 = vadd.f32 %v2091, %v2095
      %v2126 = vadd.f32 %v2092, %v2094
      %v2127 = vadd.f32 %v2093, %v2095
      %v2128 = vmax.f32 %v2096, %v2097
      %v2129 = vrot.slane %v2128, 4
      %v2130 = vmax.f32 %v2128, %v2129
      %v2131 = vrot.slane %v2130, 2
      %v2132 = vmax.f32 %v2130, %v2131
      %v2133 = vrot.slane %v2132, 1
      %v2134 = vmax.f32 %v2132, %v2133
      %v2135 = vmax.f32 %v2098, %v2099
      %v2136 = vrot.slane %v2135, 4
      %v2137 = vmax.f32 %v2135, %v2136
      %v2138 = vrot.slane %v2137, 2
      %v2139 = vmax.f32 %v2137, %v2138
      %v2140 = vrot.slane %v2139, 1
      %v2141 = vmax.f32 %v2139, %v2140
      %v2142 = vmax.f32 %v2100, %v2101
      %v2143 = vrot.slane %v2142, 4
      %v2144 = vmax.f32 %v2142, %v2143
      %v2145 = vrot.slane %v2144, 2
      %v2146 = vmax.f32 %v2144, %v2145
      %v2147 = vrot.slane %v2146, 1
      %v2148 = vmax.f32 %v2146, %v2147
      %v2149 = vmax.f32 %v2102, %v2103
      %v2150 = vrot.slane %v2149, 4
      %v2151 = vmax.f32 %v2149, %v2150
      %v2152 = vrot.slane %v2151, 2
      %v2153 = vmax.f32 %v2151, %v2152
      %v2154 = vrot.slane %v2153, 1
      %v2155 = vmax.f32 %v2153, %v2154
      %v2156 = vmax.f32 %v2104, %v2105
      %v2157 = vrot.slane %v2156, 4
      %v2158 = vmax.f32 %v2156, %v2157
      %v2159 = vrot.slane %v2158, 2
      %v2160 = vmax.f32 %v2158, %v2159
      %v2161 = vrot.slane %v2160, 1
      %v2162 = vmax.f32 %v2160, %v2161
      %v2163 = vmax.f32 %v2106, %v2107
      %v2164 = vrot.slane %v2163, 4
      %v2165 = vmax.f32 %v2163, %v2164
      %v2166 = vrot.slane %v2165, 2
      %v2167 = vmax.f32 %v2165, %v2166
      %v2168 = vrot.slane %v2167, 1
      %v2169 = vmax.f32 %v2167, %v2168
      %v2170 = vmax.f32 %v2108, %v2109
      %v2171 = vrot.slane %v2170, 4
      %v2172 = vmax.f32 %v2170, %v2171
      %v2173 = vrot.slane %v2172, 2
      %v2174 = vmax.f32 %v2172, %v2173
      %v2175 = vrot.slane %v2174, 1
      %v2176 = vmax.f32 %v2174, %v2175
      %v2177 = vmax.f32 %v2110, %v2111
      %v2178 = vrot.slane %v2177, 4
      %v2179 = vmax.f32 %v2177, %v2178
      %v2180 = vrot.slane %v2179, 2
      %v2181 = vmax.f32 %v2179, %v2180
      %v2182 = vrot.slane %v2181, 1
      %v2183 = vmax.f32 %v2181, %v2182
      %v2184 = vmax.f32 %v2112, %v2113
      %v2185 = vrot.slane %v2184, 4
      %v2186 = vmax.f32 %v2184, %v2185
      %v2187 = vrot.slane %v2186, 2
      %v2188 = vmax.f32 %v2186, %v2187
      %v2189 = vrot.slane %v2188, 1
      %v2190 = vmax.f32 %v2188, %v2189
      %v2191 = vmax.f32 %v2114, %v2115
      %v2192 = vrot.slane %v2191, 4
      %v2193 = vmax.f32 %v2191, %v2192
      %v2194 = vrot.slane %v2193, 2
      %v2195 = vmax.f32 %v2193, %v2194
      %v2196 = vrot.slane %v2195, 1
      %v2197 = vmax.f32 %v2195, %v2196
      %v2198 = vmax.f32 %v2116, %v2117
      %v2199 = vrot.slane %v2198, 4
      %v2200 = vmax.f32 %v2198, %v2199
      %v2201 = vrot.slane %v2200, 2
      %v2202 = vmax.f32 %v2200, %v2201
      %v2203 = vrot.slane %v2202, 1
      %v2204 = vmax.f32 %v2202, %v2203
      %v2205 = vmax.f32 %v2118, %v2119
      %v2206 = vrot.slane %v2205, 4
      %v2207 = vmax.f32 %v2205, %v2206
      %v2208 = vrot.slane %v2207, 2
      %v2209 = vmax.f32 %v2207, %v2208
      %v2210 = vrot.slane %v2209, 1
      %v2211 = vmax.f32 %v2209, %v2210
      %v2212 = vmax.f32 %v2120, %v2121
      %v2213 = vrot.slane %v2212, 4
      %v2214 = vmax.f32 %v2212, %v2213
      %v2215 = vrot.slane %v2214, 2
      %v2216 = vmax.f32 %v2214, %v2215
      %v2217 = vrot.slane %v2216, 1
      %v2218 = vmax.f32 %v2216, %v2217
      %v2219 = vmax.f32 %v2122, %v2123
      %v2220 = vrot.slane %v2219, 4
      %v2221 = vmax.f32 %v2219, %v2220
      %v2222 = vrot.slane %v2221, 2
      %v2223 = vmax.f32 %v2221, %v2222
      %v2224 = vrot.slane %v2223, 1
      %v2225 = vmax.f32 %v2223, %v2224
      %v2226 = vmax.f32 %v2124, %v2125
      %v2227 = vrot.slane %v2226, 4
      %v2228 = vmax.f32 %v2226, %v2227
      %v2229 = vrot.slane %v2228, 2
      %v2230 = vmax.f32 %v2228, %v2229
      %v2231 = vrot.slane %v2230, 1
      %v2232 = vmax.f32 %v2230, %v2231
      %v2233 = vmax.f32 %v2126, %v2127
      %v2234 = vrot.slane %v2233, 4
      %v2235 = vmax.f32 %v2233, %v2234
      %v2236 = vrot.slane %v2235, 2
      %v2237 = vmax.f32 %v2235, %v2236
      %v2238 = vrot.slane %v2237, 1
      %v2239 = vmax.f32 %v2237, %v2238
      %v2240 = vld [vmem:[%s3 + $0x20] sm:$0xff]
      %v2241 = vld [vmem:[%s3 + $0x28] sm:$0xff]
      %v2242 = vld [vmem:[%s3 + $0x30] sm:$0xff]
      %v2243 = vld [vmem:[%s3 + $0x38] sm:$0xff]
      %v2244 = vld [vmem:[%s3 + $0x40] sm:$0xff]
      %v2245 = vld [vmem:[%s3 + $0x48] sm:$0xff]
      %v2246 = vld [vmem:[%s3 + $0x50] sm:$0xff]
      %v2247 = vld [vmem:[%s3 + $0x58] sm:$0xff]
      %v2248 = vld [vmem:[%s3 + $0x60] sm:$0xff]
      %v2249 = vld [vmem:[%s3 + $0x68] sm:$0xff]
      %v2250 = vld [vmem:[%s3 + $0x70] sm:$0xff]
      %v2251 = vld [vmem:[%s3 + $0x78] sm:$0xff]
      %v2252 = vld [vmem:[%s3 + $0x80] sm:$0xff]
      %v2253 = vld [vmem:[%s3 + $0x88] sm:$0xff]
      %v2254 = vld [vmem:[%s3 + $0x90] sm:$0xff]
      %v2255 = vld [vmem:[%s3 + $0x98] sm:$0xff]
      %v2256 = vld [vmem:[%s3 + $0x1] sm:$0x1]
      %v2257 = vlaneseq
      %v2258 = vshrl.u32 %v2257, 7
      %v2259 = vsub.s32 0, %v2258
      %v2260 = vrot.slane %v2256, %v2259
      %vm2277 = vcmask 1041409
      %v2278 = vsel %vm2277, %v2141, %v2134
      %vm2279 = vcmask 1042434
      %v2280 = vsel %vm2279, %v2148, %v2278
      %vm2281 = vcmask 1043459
      %v2282 = vsel %vm2281, %v2155, %v2280
      %vm2283 = vcmask 1044484
      %v2284 = vsel %vm2283, %v2162, %v2282
      %vm2285 = vcmask 1045509
      %v2286 = vsel %vm2285, %v2169, %v2284
      %vm2287 = vcmask 1046534
      %v2288 = vsel %vm2287, %v2176, %v2286
      %vm2289 = vcmask 1047559
      %v2290 = vsel %vm2289, %v2183, %v2288
      %v2291 = vsel %vm2277, %v2197, %v2190
      %v2292 = vsel %vm2279, %v2204, %v2291
      %v2293 = vsel %vm2281, %v2211, %v2292
      %v2294 = vsel %vm2283, %v2218, %v2293
      %v2295 = vsel %vm2285, %v2225, %v2294
      %v2296 = vsel %vm2287, %v2232, %v2295
      %v2297 = vsel %vm2289, %v2239, %v2296
      %2300 = vmatprep.subr.mxu0 0.0
      %2301 = vmatpush1.msra.mxu0 %v2240
      %2302 = vmatprep.subr.mxu0 0.0
      %2303 = vmatpush1.msra.mxu0 %v2241
      %2304 = vmatprep.subr.mxu0 0.0
      %2305 = vmatpush1.msra.mxu0 %v2242
      %2306 = vmatprep.subr.mxu0 0.0
      %2307 = vmatpush1.msra.mxu0 %v2243
      %2308 = vmatprep.subr.mxu0 0.0
      %2309 = vmatpush1.msra.mxu0 %v2244
      %2310 = vmatprep.subr.mxu0 0.0
      %2311 = vmatpush1.msra.mxu0 %v2245
      %2312 = vmatprep.subr.mxu0 0.0
      %2313 = vmatpush1.msra.mxu0 %v2246
      %2314 = vmatprep.subr.mxu0 0.0
      %2315 = vmatpush1.msra.mxu0 %v2247
      %2316 = vmatprep.subr.mxu0 0.0
      %2317 = vmatpush1.msra.mxu0 %v2248
      %2318 = vmatprep.subr.mxu0 0.0
      %2319 = vmatpush1.msra.mxu0 %v2249
      %2320 = vmatprep.subr.mxu0 0.0
      %2321 = vmatpush1.msra.mxu0 %v2250
      %2322 = vmatprep.subr.mxu0 0.0
      %2323 = vmatpush1.msra.mxu0 %v2251
      %2324 = vmatprep.subr.mxu0 0.0
      %2325 = vmatpush1.msra.mxu0 %v2252
      %2326 = vmatprep.subr.mxu0 0.0
      %2327 = vmatpush1.msra.mxu0 %v2253
      %2328 = vmatprep.subr.mxu0 0.0
      %2329 = vmatpush1.msra.mxu0 %v2254
      %2330 = vmatprep.subr.mxu0 0.0
      %2331 = vmatpush1.msra.mxu0 %v2255
      %2332 = vmatprep.subr.mxu0 0.0
      %2333 = vmatpush1.msra.mxu0 0.0
      %2334 = vmatprep.subr.mxu0 0.0
      %2335 = vmatpush1.msra.mxu0 0.0
      %2336 = vmatprep.subr.mxu0 0.0
      %2337 = vmatpush1.msra.mxu0 0.0
      %2338 = vmatprep.subr.mxu0 0.0
      %2339 = vmatpush1.msra.mxu0 0.0
      %2340 = vmatprep.subr.mxu0 0.0
      %2341 = vmatpush1.msra.mxu0 0.0
      %2342 = vmatprep.subr.mxu0 0.0
      %2343 = vmatpush1.msra.mxu0 0.0
      %2344 = vmatprep.subr.mxu0 0.0
      %2345 = vmatpush1.msra.mxu0 0.0
      %2346 = vmatprep.subr.mxu0 0.0
      %2347 = vmatpush1.msra.mxu0 0.0
      %2348 = vmatprep.subr.mxu0 0.0
      %2349 = vmatpush1.msra.mxu0 0.0
      %2350 = vmatprep.subr.mxu0 0.0
      %2351 = vmatpush1.msra.mxu0 0.0
      %2352 = vmatprep.subr.mxu0 0.0
      %2353 = vmatpush1.msra.mxu0 0.0
      %2354 = vmatprep.subr.mxu0 0.0
      %2355 = vmatpush1.msra.mxu0 0.0
      %2356 = vmatprep.subr.mxu0 0.0
      %2357 = vmatpush1.msra.mxu0 0.0
      %2358 = vmatprep.subr.mxu0 0.0
      %2359 = vmatpush1.msra.mxu0 0.0
      %2360 = vmatprep.subr.mxu0 0.0
      %2361 = vmatpush1.msra.mxu0 0.0
      %2362 = vmatprep.subr.mxu0 0.0
      %2363 = vmatpush1.msra.mxu0 0.0
      %2364 = vmatprep.mubr.f32.mxu0 0.0
      %2365 = vmatmul.mubr.f32.gmra.mrb[0].mxu0 %v2290
      %v2366 = vpop.f32.mrb[0].mxu0
      %v2367 = vadd.f32 %v2260, %v2366
      %v2368 = vpop.f32.mrb[0].mxu0
      %2369 = vmatprep.mubr.f32.mxu0 0.0
      %2370 = vmatmul.mubr.f32.gmra.mrb[0].mxu0 %v2297
      %v2371 = vpop.f32.mrb[0].mxu0
      %v2372 = vadd.f32 %v2260, %v2371
      %v2373 = vpop.f32.mrb[0].mxu0
      %2374 = vdwg.mxu0
      %2375 = vst [vmem:[%s199] sm:$0xff] %v2367
      %2376 = vst [vmem:[%s199 + $0x8] sm:$0xff] %v2372
      %s2377 = smul.u32 2, %s15
      %p2378 = scmp.lt.s32.totalorder %s2377, 3
      %s2379 = scalar_select %p2378, %s2377, 3
      %s2380 = smul.addr %s2379, 8
      %s2381 = scalar_lea.vmem %s4, %s2380
      // Predicated region
      $region37: #{yelp_cnn_forward.1} parent=35 // pred_check
        %p2382 = pneg %p122
      $region38: #{yelp_cnn_forward.1} parent=35 // pred_check_branch
        %2384 = sbr.rel (%p2382) target = $region40
      $region39: #{yelp_cnn_forward.1} parent=35 // pred_region
        %s2385 = smul.u32 2, %s15
      $region40: #{yelp_cnn_forward.1} parent=35 // pred_fallthru
        _
    $region36: #{yelp_cnn_forward.1} parent=5 // pred_fallthru
      _
    %p2386 = scmp.le.s32.totalorder 2, %s10
    // Predicated region
    $region41: #{yelp_cnn_forward.1} parent=5 // pred_check
      %p2387 = pneg %p2386
    $region42: #{yelp_cnn_forward.1} parent=5 // pred_check_branch
      %2389 = sbr.rel (%p2387) target = $region44
    $region43: #{yelp_cnn_forward.1} parent=5 // pred_region
      %s2390 = ssub.s32 %s10, 2
      // Predicated region
      $region45: #{yelp_cnn_forward.1} parent=43 // pred_check
        %p2391 = pneg %p128
      $region46: #{yelp_cnn_forward.1} parent=43 // pred_check_branch
        %2393 = sbr.rel (%p2391) target = $region48
      $region47: #{yelp_cnn_forward.1} parent=43 // pred_region
        %s2394 = smul.u32 2, %s16
        %p2395 = scmp.lt.s32.totalorder %s2394, 3
        %s2396 = scalar_select %p2395, %s2394, 3
        %s2397 = smul.addr %s2396, 8
        %s2398 = scalar_lea.vmem %s4, %s2397
      $region48: #{yelp_cnn_forward.1} parent=43 // pred_fallthru
        _
    $region44: #{yelp_cnn_forward.1} parent=5 // pred_fallthru
      _
  $region6: #{yelp_cnn_forward.1} parent=0 // loop_footer
    %s14 = sadd.s32 1, %s10
  $region7: #{yelp_cnn_forward.1} parent=0 // loop_footer_branch
    %9 = sbr.rel target = $region3
  $region8: #{yelp_cnn_forward.1} parent=0 // loop_exit
    _

</llo_original>
